<compile_context>
chip_gen: v7x
topology: tpu7x:2x2x1
jax: 0.10.0
libtpu: 0.0.40
codegen_flags: <defaults>
</compile_context>

<pallas_src>
import functools

import jax
import jax.numpy as jnp
import numpy as np
from jax.experimental import pallas as pl
from jax.experimental.pallas import tpu as pltpu


def rnn_pred_kernel(x_ref, wih_ref, whh_ref, b_lstm_ref,
                    w1_ref, b1_ref, w2_ref, b2_ref, w3_ref, b3_ref,
                    out_ref, hseq_ref, *, C, T):
    H = whh_ref.shape[0]
    Bb = x_ref.shape[0]

    x = x_ref[...]            # (Bb, C*T) f32; flat col t*C+c == x.view(B,T,C)[:, t, c]
    wih = wih_ref[...]        # (1, 4H)  f32, gate order [i,f,o,g], i/f/o cols pre-scaled by 0.5
    whh = whh_ref[...]        # (H, 4H)  bf16, same permutation / scaling
    b_lstm = b_lstm_ref[...]  # (1, 4H)  f32 = b_ih + b_hh (fused), same permutation / scaling

    # Recurrent state: h carried in bf16 (it is only ever consumed as an MXU operand),
    # cell state c stays f32.
    h_bf = jnp.zeros((Bb, H), jnp.bfloat16)
    c = jnp.zeros((Bb, H), jnp.float32)

    # C and T are small here, so the loops are fully unrolled (full LLO visibility).
    # For T or C beyond ~16, switch to lax.fori_loop(..., unroll=True) carrying (h_bf, c)
    # and index hseq_ref with pl.ds(t*H, H) to bound live ranges / compile time.
    for ci in range(C):
        last_channel = (ci == C - 1)
        for t in range(T):
            col = t * C + ci
            # Input projection computed per-step (no dependency on h, so the scheduler
            # overlaps it with the serial chain).  Deliberately NOT list-hoisted: holding
            # T of these (Bb,4H) tiles live would blow the 64-vreg file and spill inside
            # the recurrence.
            gates_in = x[:, col:col + 1] * wih + b_lstm
            # One bf16 MXU dot per step on the serial chain.
            gates = gates_in + jnp.dot(h_bf, whh, preferred_element_type=jnp.float32)
            # Single EUP push for the whole 4H gate slab: i/f/o pre-activations were
            # pre-scaled by 0.5, so sigmoid(z) = 0.5*tanh(z/2) + 0.5.
            t_all = jnp.tanh(gates)
            sig = 0.5 * t_all[:, :3 * H] + 0.5
            i_g = sig[:, 0 * H:1 * H]
            f_g = sig[:, 1 * H:2 * H]
            o_g = sig[:, 2 * H:3 * H]
            g_g = t_all[:, 3 * H:4 * H]
            c = f_g * c + i_g * g_g
            # Single bf16 cast per step, shared by the next recurrent dot and linear1 staging.
            h_bf = (o_g * jnp.tanh(c)).astype(jnp.bfloat16)
            if last_channel:
                # Stage h_t in VMEM; linear1 runs as ONE K=T*H matmul after the loop, so no
                # per-step W1-slice restage competes with the recurrent dot for the MXU.
                hseq_ref[:, t * H:(t + 1) * H] = h_bf

    # Post-loop head: linear1+ReLU, linear2+ReLU, linear3.
    out_flat = hseq_ref[...]                                   # (Bb, T*H) bf16
    r1 = jnp.maximum(
        jnp.dot(out_flat, w1_ref[...], preferred_element_type=jnp.float32) + b1_ref[...], 0.0)
    r2 = jnp.maximum(
        jnp.dot(r1.astype(jnp.bfloat16), w2_ref[...],
                preferred_element_type=jnp.float32) + b2_ref[...], 0.0)
    res = jnp.dot(r2.astype(jnp.bfloat16), w3_ref[...],
                  preferred_element_type=jnp.float32) + b3_ref[...]
    out_ref[...] = res.astype(out_ref.dtype)


def _prep_gate_weights(w, H):
    """Reorder LSTM gate columns from PyTorch's [i,f,g,o] to [i,f,o,g] and pre-scale the
    sigmoid gates (i,f,o) by 0.5 so the kernel can use a single tanh slab per step."""
    w = jnp.concatenate([w[..., 0:2 * H], w[..., 3 * H:4 * H], w[..., 2 * H:3 * H]], axis=-1)
    scale = jnp.concatenate(
        [jnp.full((3 * H,), 0.5, w.dtype), jnp.ones((H,), w.dtype)], axis=0)
    return w * scale


def _choose_bb(B):
    """Generation-aware batch block. v4/v5: 128 fills an MXU pass; v6e/v7x: up to 256.
    For non-tiny batches use at least 2 grid steps so both v7x TensorCores get work."""
    if B <= 8:
        return B
    try:
        kind = jax.devices()[0].device_kind.lower()
    except Exception:
        kind = ""
    cap = 128 if ("v5" in kind or "v4" in kind) else 256
    half = (B + 1) // 2
    bb = min(cap, ((half + 7) // 8) * 8)
    return max(8, bb)


def rnn_pred_forward(x, params):
    (wih_t, whh_t, b_lstm, w1_t, b1, w2_t, b2, w3_t, b3) = params
    B, C, T = x.shape
    H = whh_t.shape[0]
    OS = w3_t.shape[1]

    # torch `x.view(B, T, C)` is a pure reinterpretation of the contiguous buffer; the kernel
    # indexes the flat (B, C*T) buffer directly (col = t*C + c).
    x_flat = x.reshape(B, C * T).astype(jnp.float32)

    # Layout / dtype / gate-order plumbing only (no forward compute hoisted out of the kernel).
    wih_k = _prep_gate_weights(wih_t, H)
    whh_k = _prep_gate_weights(whh_t, H).astype(jnp.bfloat16)
    b_k = _prep_gate_weights(b_lstm, H)
    w1_k = w1_t.astype(jnp.bfloat16)
    w2_k = w2_t.astype(jnp.bfloat16)
    w3_k = w3_t.astype(jnp.bfloat16)

    bb = _choose_bb(B)
    B_pad = ((B + bb - 1) // bb) * bb
    if B_pad != B:
        x_flat = jnp.pad(x_flat, ((0, B_pad - B), (0, 0)))
    grid = (B_pad // bb,)

    out = pl.pallas_call(
        functools.partial(rnn_pred_kernel, C=C, T=T),
        out_shape=jax.ShapeDtypeStruct((B_pad, OS), jnp.float32),
        grid=grid,
        in_specs=[
            pl.BlockSpec((bb, C * T), lambda i: (i, 0)),
            pl.BlockSpec(wih_k.shape, lambda i: (0, 0)),
            pl.BlockSpec(whh_k.shape, lambda i: (0, 0)),
            pl.BlockSpec(b_k.shape, lambda i: (0, 0)),
            pl.BlockSpec(w1_k.shape, lambda i: (0, 0)),
            pl.BlockSpec(b1.shape, lambda i: (0, 0)),
            pl.BlockSpec(w2_k.shape, lambda i: (0, 0)),
            pl.BlockSpec(b2.shape, lambda i: (0, 0)),
            pl.BlockSpec(w3_k.shape, lambda i: (0, 0)),
            pl.BlockSpec(b3.shape, lambda i: (0, 0)),
        ],
        out_specs=pl.BlockSpec((bb, OS), lambda i: (i, 0)),
        scratch_shapes=[pltpu.VMEM((bb, T * H), jnp.bfloat16)],   # staged h_t sequence
        compiler_params=pltpu.CompilerParams(
            dimension_semantics=("parallel",),
            vmem_limit_bytes=32 * 1024 * 1024),
    )(x_flat, wih_k, whh_k, b_k, w1_k, b1, w2_k, b2, w3_k, b3)

    return out[:B] if B_pad != B else out


def rnn_pred_reference(x, params):
    """Pure-JAX f32 mirror of the PyTorch forward (original i,f,g,o gate order)."""
    (wih_t, whh_t, b_lstm, w1_t, b1, w2_t, b2, w3_t, b3) = params
    B, C, T = x.shape
    H = whh_t.shape[0]
    x_view = x.reshape(B, T, C)       # torch .view semantics (pure reinterpretation)
    h = jnp.zeros((B, H), jnp.float32)
    c = jnp.zeros((B, H), jnp.float32)
    hs = None
    for ci in range(C):
        hs = []
        for t in range(T):
            xt = x_view[:, t, ci][:, None]
            gates = xt * wih_t + h @ whh_t + b_lstm
            i_g = jax.nn.sigmoid(gates[:, 0:H])
            f_g = jax.nn.sigmoid(gates[:, H:2 * H])
            g_g = jnp.tanh(gates[:, 2 * H:3 * H])
            o_g = jax.nn.sigmoid(gates[:, 3 * H:4 * H])
            c = f_g * c + i_g * g_g
            h = o_g * jnp.tanh(c)
            hs.append(h)
    out_flat = jnp.concatenate(hs, axis=1)
    r1 = jnp.maximum(out_flat @ w1_t + b1, 0.0)
    r2 = jnp.maximum(r1 @ w2_t + b2, 0.0)
    return r2 @ w3_t + b3


if __name__ == "__main__":
    # Shapes consistent with the module's canonical use:
    # entries.reshape(B, 1, ins)  ->  x: (B, C=1, T=ins);  hs=(32, _, 16), os=5
    B, C, INS, H, H2, OS = 2, 1, 8, 32, 16, 5
    T = INS

    key = jax.random.PRNGKey(0)
    ks = jax.random.split(key, 10)
    s = 0.1
    wih_t = s * jax.random.normal(ks[0], (1, 4 * H), jnp.float32)        # W_ih^T (input_size=1)
    whh_t = s * jax.random.normal(ks[1], (H, 4 * H), jnp.float32)        # W_hh^T
    b_lstm = s * jax.random.normal(ks[2], (1, 4 * H), jnp.float32)       # b_ih + b_hh
    w1_t = s * jax.random.normal(ks[3], (INS * H, H), jnp.float32)       # linear1.weight^T
    b1 = s * jax.random.normal(ks[4], (1, H), jnp.float32)
    w2_t = s * jax.random.normal(ks[5], (H, H2), jnp.float32)            # linear2.weight^T
    b2 = s * jax.random.normal(ks[6], (1, H2), jnp.float32)
    w3_t = s * jax.random.normal(ks[7], (H2, OS), jnp.float32)           # linear3.weight^T
    b3 = s * jax.random.normal(ks[8], (1, OS), jnp.float32)
    x = jax.random.normal(ks[9], (B, C, T), jnp.float32)

    params = (wih_t, whh_t, b_lstm, w1_t, b1, w2_t, b2, w3_t, b3)

    out = rnn_pred_forward(x, params)
    out = jax.block_until_ready(out)
    assert out.shape == (B, OS)

    ref = rnn_pred_reference(x, params)
    # bf16 MXU operands (f32 accumulation/state) -> looser tolerance than pure f32.
    np.testing.assert_allclose(np.asarray(out), np.asarray(ref), rtol=1e-2, atol=1e-2)

    print("KERNEL_OK")
</pallas_src>

<mosaic_0001>
module attributes {stable_mosaic.version = 11 : i64} {
  func.func @rnn_pred_kernel(%arg0: i32, %arg1: memref<2x8xf32, #tpu.memory_space<vmem>>, %arg2: memref<1x128xf32, #tpu.memory_space<vmem>>, %arg3: memref<32x128xbf16, #tpu.memory_space<vmem>>, %arg4: memref<1x128xf32, #tpu.memory_space<vmem>>, %arg5: memref<256x32xbf16, #tpu.memory_space<vmem>>, %arg6: memref<1x32xf32, #tpu.memory_space<vmem>>, %arg7: memref<32x16xbf16, #tpu.memory_space<vmem>>, %arg8: memref<1x16xf32, #tpu.memory_space<vmem>>, %arg9: memref<16x5xbf16, #tpu.memory_space<vmem>>, %arg10: memref<1x5xf32, #tpu.memory_space<vmem>>, %arg11: memref<2x5xf32, #tpu.memory_space<vmem>>, %arg12: memref<2x256xbf16, #tpu.memory_space<vmem>>) attributes {dimension_semantics = [#tpu.dimension_semantics<parallel>], iteration_bounds = array<i64: 1>, scalar_prefetch = 0 : i64, scratch_operands = 1 : i64, tpu.core_type = #tpu.core_type<tc>, window_params = [{transform_indices = @transform_0, window_bounds = array<i64: 2, 8>}, {pipeline_mode = #tpu.pipeline_mode<synchronous>, transform_indices = @transform_1, window_bounds = array<i64: 1, 128>}, {pipeline_mode = #tpu.pipeline_mode<synchronous>, transform_indices = @transform_2, window_bounds = array<i64: 32, 128>}, {pipeline_mode = #tpu.pipeline_mode<synchronous>, transform_indices = @transform_3, window_bounds = array<i64: 1, 128>}, {pipeline_mode = #tpu.pipeline_mode<synchronous>, transform_indices = @transform_4, window_bounds = array<i64: 256, 32>}, {pipeline_mode = #tpu.pipeline_mode<synchronous>, transform_indices = @transform_5, window_bounds = array<i64: 1, 32>}, {pipeline_mode = #tpu.pipeline_mode<synchronous>, transform_indices = @transform_6, window_bounds = array<i64: 32, 16>}, {pipeline_mode = #tpu.pipeline_mode<synchronous>, transform_indices = @transform_7, window_bounds = array<i64: 1, 16>}, {pipeline_mode = #tpu.pipeline_mode<synchronous>, transform_indices = @transform_8, window_bounds = array<i64: 16, 5>}, {pipeline_mode = #tpu.pipeline_mode<synchronous>, transform_indices = @transform_9, window_bounds = array<i64: 1, 5>}, {transform_indices = @transform_10, window_bounds = array<i64: 2, 5>}]} {
    %c0 = arith.constant 0 : index
    %c0_0 = arith.constant 0 : index
    %0 = vector.load %arg1[%c0, %c0_0] : memref<2x8xf32, #tpu.memory_space<vmem>>, vector<2x8xf32>
    %c0_1 = arith.constant 0 : index
    %c0_2 = arith.constant 0 : index
    %1 = vector.load %arg2[%c0_1, %c0_2] : memref<1x128xf32, #tpu.memory_space<vmem>>, vector<1x128xf32>
    %c0_3 = arith.constant 0 : index
    %c0_4 = arith.constant 0 : index
    %2 = vector.load %arg3[%c0_3, %c0_4] : memref<32x128xbf16, #tpu.memory_space<vmem>>, vector<32x128xbf16>
    %c0_5 = arith.constant 0 : index
    %c0_6 = arith.constant 0 : index
    %3 = vector.load %arg4[%c0_5, %c0_6] : memref<1x128xf32, #tpu.memory_space<vmem>>, vector<1x128xf32>
    %cst = arith.constant 0.000000e+00 : bf16
    %4 = vector.broadcast %cst : bf16 to vector<2x32xbf16>
    %cst_7 = arith.constant 0.000000e+00 : f32
    %5 = vector.broadcast %cst_7 : f32 to vector<2x32xf32>
    %6 = vector.extract_strided_slice %0 {offsets = [0, 0], sizes = [2, 1], strides = [1, 1]} : vector<2x8xf32> to vector<2x1xf32>
    %7 = vector.broadcast %6 : vector<2x1xf32> to vector<2x128xf32>
    %8 = vector.broadcast %1 : vector<1x128xf32> to vector<2x128xf32>
    %9 = arith.mulf %7, %8 : vector<2x128xf32>
    %10 = vector.broadcast %3 : vector<1x128xf32> to vector<2x128xf32>
    %11 = arith.addf %9, %10 : vector<2x128xf32>
    %cst_8 = arith.constant dense<0.000000e+00> : vector<2x128xf32>
    %12 = tpu.matmul %4, %2, %cst_8 {dimension_numbers = #tpu.dot_dimension_numbers<[1], [0], [0], [1], [0, 0, 1, 1], [], []>} : vector<2x32xbf16>, vector<32x128xbf16>, vector<2x128xf32> -> vector<2x128xf32>
    %13 = arith.addf %11, %12 : vector<2x128xf32>
    %14 = math.tanh %13 : vector<2x128xf32>
    %15 = vector.extract_strided_slice %14 {offsets = [0, 0], sizes = [2, 96], strides = [1, 1]} : vector<2x128xf32> to vector<2x96xf32>
    %cst_9 = arith.constant 5.000000e-01 : f32
    %16 = vector.broadcast %cst_9 : f32 to vector<2x96xf32>
    %17 = arith.mulf %16, %15 : vector<2x96xf32>
    %cst_10 = arith.constant 5.000000e-01 : f32
    %18 = vector.broadcast %cst_10 : f32 to vector<2x96xf32>
    %19 = arith.addf %17, %18 : vector<2x96xf32>
    %20 = vector.extract_strided_slice %19 {offsets = [0, 0], sizes = [2, 32], strides = [1, 1]} : vector<2x96xf32> to vector<2x32xf32>
    %21 = vector.extract_strided_slice %19 {offsets = [0, 32], sizes = [2, 32], strides = [1, 1]} : vector<2x96xf32> to vector<2x32xf32>
    %22 = vector.extract_strided_slice %19 {offsets = [0, 64], sizes = [2, 32], strides = [1, 1]} : vector<2x96xf32> to vector<2x32xf32>
    %23 = vector.extract_strided_slice %14 {offsets = [0, 96], sizes = [2, 32], strides = [1, 1]} : vector<2x128xf32> to vector<2x32xf32>
    %24 = arith.mulf %21, %5 : vector<2x32xf32>
    %25 = arith.mulf %20, %23 : vector<2x32xf32>
    %26 = arith.addf %24, %25 : vector<2x32xf32>
    %27 = math.tanh %26 : vector<2x32xf32>
    %28 = arith.mulf %22, %27 : vector<2x32xf32>
    %29 = arith.truncf %28 : vector<2x32xf32> to vector<2x32xbf16>
    %c0_11 = arith.constant 0 : index
    %c0_12 = arith.constant 0 : index
    %30 = vector.load %arg12[%c0_11, %c0_12] : memref<2x256xbf16, #tpu.memory_space<vmem>>, vector<2x32xbf16>
    tpu.vector_store %arg12[%c0_11, %c0_12], %29 {strides = array<i32>} : memref<2x256xbf16, #tpu.memory_space<vmem>>, vector<2x32xbf16>,
    %31 = vector.extract_strided_slice %0 {offsets = [0, 1], sizes = [2, 1], strides = [1, 1]} : vector<2x8xf32> to vector<2x1xf32>
    %32 = vector.broadcast %31 : vector<2x1xf32> to vector<2x128xf32>
    %33 = vector.broadcast %1 : vector<1x128xf32> to vector<2x128xf32>
    %34 = arith.mulf %32, %33 : vector<2x128xf32>
    %35 = vector.broadcast %3 : vector<1x128xf32> to vector<2x128xf32>
    %36 = arith.addf %34, %35 : vector<2x128xf32>
    %cst_13 = arith.constant dense<0.000000e+00> : vector<2x128xf32>
    %37 = tpu.matmul %29, %2, %cst_13 {dimension_numbers = #tpu.dot_dimension_numbers<[1], [0], [0], [1], [0, 0, 1, 1], [], []>} : vector<2x32xbf16>, vector<32x128xbf16>, vector<2x128xf32> -> vector<2x128xf32>
    %38 = arith.addf %36, %37 : vector<2x128xf32>
    %39 = math.tanh %38 : vector<2x128xf32>
    %40 = vector.extract_strided_slice %39 {offsets = [0, 0], sizes = [2, 96], strides = [1, 1]} : vector<2x128xf32> to vector<2x96xf32>
    %cst_14 = arith.constant 5.000000e-01 : f32
    %41 = vector.broadcast %cst_14 : f32 to vector<2x96xf32>
    %42 = arith.mulf %41, %40 : vector<2x96xf32>
    %cst_15 = arith.constant 5.000000e-01 : f32
    %43 = vector.broadcast %cst_15 : f32 to vector<2x96xf32>
    %44 = arith.addf %42, %43 : vector<2x96xf32>
    %45 = vector.extract_strided_slice %44 {offsets = [0, 0], sizes = [2, 32], strides = [1, 1]} : vector<2x96xf32> to vector<2x32xf32>
    %46 = vector.extract_strided_slice %44 {offsets = [0, 32], sizes = [2, 32], strides = [1, 1]} : vector<2x96xf32> to vector<2x32xf32>
    %47 = vector.extract_strided_slice %44 {offsets = [0, 64], sizes = [2, 32], strides = [1, 1]} : vector<2x96xf32> to vector<2x32xf32>
    %48 = vector.extract_strided_slice %39 {offsets = [0, 96], sizes = [2, 32], strides = [1, 1]} : vector<2x128xf32> to vector<2x32xf32>
    %49 = arith.mulf %46, %26 : vector<2x32xf32>
    %50 = arith.mulf %45, %48 : vector<2x32xf32>
    %51 = arith.addf %49, %50 : vector<2x32xf32>
    %52 = math.tanh %51 : vector<2x32xf32>
    %53 = arith.mulf %47, %52 : vector<2x32xf32>
    %54 = arith.truncf %53 : vector<2x32xf32> to vector<2x32xbf16>
    %c0_16 = arith.constant 0 : index
    %c32 = arith.constant 32 : index
    %55 = vector.load %arg12[%c0_16, %c32] : memref<2x256xbf16, #tpu.memory_space<vmem>>, vector<2x32xbf16>
    tpu.vector_store %arg12[%c0_16, %c32], %54 {strides = array<i32>} : memref<2x256xbf16, #tpu.memory_space<vmem>>, vector<2x32xbf16>,
    %56 = vector.extract_strided_slice %0 {offsets = [0, 2], sizes = [2, 1], strides = [1, 1]} : vector<2x8xf32> to vector<2x1xf32>
    %57 = vector.broadcast %56 : vector<2x1xf32> to vector<2x128xf32>
    %58 = vector.broadcast %1 : vector<1x128xf32> to vector<2x128xf32>
    %59 = arith.mulf %57, %58 : vector<2x128xf32>
    %60 = vector.broadcast %3 : vector<1x128xf32> to vector<2x128xf32>
    %61 = arith.addf %59, %60 : vector<2x128xf32>
    %cst_17 = arith.constant dense<0.000000e+00> : vector<2x128xf32>
    %62 = tpu.matmul %54, %2, %cst_17 {dimension_numbers = #tpu.dot_dimension_numbers<[1], [0], [0], [1], [0, 0, 1, 1], [], []>} : vector<2x32xbf16>, vector<32x128xbf16>, vector<2x128xf32> -> vector<2x128xf32>
    %63 = arith.addf %61, %62 : vector<2x128xf32>
    %64 = math.tanh %63 : vector<2x128xf32>
    %65 = vector.extract_strided_slice %64 {offsets = [0, 0], sizes = [2, 96], strides = [1, 1]} : vector<2x128xf32> to vector<2x96xf32>
    %cst_18 = arith.constant 5.000000e-01 : f32
    %66 = vector.broadcast %cst_18 : f32 to vector<2x96xf32>
    %67 = arith.mulf %66, %65 : vector<2x96xf32>
    %cst_19 = arith.constant 5.000000e-01 : f32
    %68 = vector.broadcast %cst_19 : f32 to vector<2x96xf32>
    %69 = arith.addf %67, %68 : vector<2x96xf32>
    %70 = vector.extract_strided_slice %69 {offsets = [0, 0], sizes = [2, 32], strides = [1, 1]} : vector<2x96xf32> to vector<2x32xf32>
    %71 = vector.extract_strided_slice %69 {offsets = [0, 32], sizes = [2, 32], strides = [1, 1]} : vector<2x96xf32> to vector<2x32xf32>
    %72 = vector.extract_strided_slice %69 {offsets = [0, 64], sizes = [2, 32], strides = [1, 1]} : vector<2x96xf32> to vector<2x32xf32>
    %73 = vector.extract_strided_slice %64 {offsets = [0, 96], sizes = [2, 32], strides = [1, 1]} : vector<2x128xf32> to vector<2x32xf32>
    %74 = arith.mulf %71, %51 : vector<2x32xf32>
    %75 = arith.mulf %70, %73 : vector<2x32xf32>
    %76 = arith.addf %74, %75 : vector<2x32xf32>
    %77 = math.tanh %76 : vector<2x32xf32>
    %78 = arith.mulf %72, %77 : vector<2x32xf32>
    %79 = arith.truncf %78 : vector<2x32xf32> to vector<2x32xbf16>
    %c0_20 = arith.constant 0 : index
    %c64 = arith.constant 64 : index
    %80 = vector.load %arg12[%c0_20, %c64] : memref<2x256xbf16, #tpu.memory_space<vmem>>, vector<2x32xbf16>
    tpu.vector_store %arg12[%c0_20, %c64], %79 {strides = array<i32>} : memref<2x256xbf16, #tpu.memory_space<vmem>>, vector<2x32xbf16>,
    %81 = vector.extract_strided_slice %0 {offsets = [0, 3], sizes = [2, 1], strides = [1, 1]} : vector<2x8xf32> to vector<2x1xf32>
    %82 = vector.broadcast %81 : vector<2x1xf32> to vector<2x128xf32>
    %83 = vector.broadcast %1 : vector<1x128xf32> to vector<2x128xf32>
    %84 = arith.mulf %82, %83 : vector<2x128xf32>
    %85 = vector.broadcast %3 : vector<1x128xf32> to vector<2x128xf32>
    %86 = arith.addf %84, %85 : vector<2x128xf32>
    %cst_21 = arith.constant dense<0.000000e+00> : vector<2x128xf32>
    %87 = tpu.matmul %79, %2, %cst_21 {dimension_numbers = #tpu.dot_dimension_numbers<[1], [0], [0], [1], [0, 0, 1, 1], [], []>} : vector<2x32xbf16>, vector<32x128xbf16>, vector<2x128xf32> -> vector<2x128xf32>
    %88 = arith.addf %86, %87 : vector<2x128xf32>
    %89 = math.tanh %88 : vector<2x128xf32>
    %90 = vector.extract_strided_slice %89 {offsets = [0, 0], sizes = [2, 96], strides = [1, 1]} : vector<2x128xf32> to vector<2x96xf32>
    %cst_22 = arith.constant 5.000000e-01 : f32
    %91 = vector.broadcast %cst_22 : f32 to vector<2x96xf32>
    %92 = arith.mulf %91, %90 : vector<2x96xf32>
    %cst_23 = arith.constant 5.000000e-01 : f32
    %93 = vector.broadcast %cst_23 : f32 to vector<2x96xf32>
    %94 = arith.addf %92, %93 : vector<2x96xf32>
    %95 = vector.extract_strided_slice %94 {offsets = [0, 0], sizes = [2, 32], strides = [1, 1]} : vector<2x96xf32> to vector<2x32xf32>
    %96 = vector.extract_strided_slice %94 {offsets = [0, 32], sizes = [2, 32], strides = [1, 1]} : vector<2x96xf32> to vector<2x32xf32>
    %97 = vector.extract_strided_slice %94 {offsets = [0, 64], sizes = [2, 32], strides = [1, 1]} : vector<2x96xf32> to vector<2x32xf32>
    %98 = vector.extract_strided_slice %89 {offsets = [0, 96], sizes = [2, 32], strides = [1, 1]} : vector<2x128xf32> to vector<2x32xf32>
    %99 = arith.mulf %96, %76 : vector<2x32xf32>
    %100 = arith.mulf %95, %98 : vector<2x32xf32>
    %101 = arith.addf %99, %100 : vector<2x32xf32>
    %102 = math.tanh %101 : vector<2x32xf32>
    %103 = arith.mulf %97, %102 : vector<2x32xf32>
    %104 = arith.truncf %103 : vector<2x32xf32> to vector<2x32xbf16>
    %c0_24 = arith.constant 0 : index
    %c96 = arith.constant 96 : index
    %105 = vector.load %arg12[%c0_24, %c96] : memref<2x256xbf16, #tpu.memory_space<vmem>>, vector<2x32xbf16>
    tpu.vector_store %arg12[%c0_24, %c96], %104 {strides = array<i32>} : memref<2x256xbf16, #tpu.memory_space<vmem>>, vector<2x32xbf16>,
    %106 = vector.extract_strided_slice %0 {offsets = [0, 4], sizes = [2, 1], strides = [1, 1]} : vector<2x8xf32> to vector<2x1xf32>
    %107 = vector.broadcast %106 : vector<2x1xf32> to vector<2x128xf32>
    %108 = vector.broadcast %1 : vector<1x128xf32> to vector<2x128xf32>
    %109 = arith.mulf %107, %108 : vector<2x128xf32>
    %110 = vector.broadcast %3 : vector<1x128xf32> to vector<2x128xf32>
    %111 = arith.addf %109, %110 : vector<2x128xf32>
    %cst_25 = arith.constant dense<0.000000e+00> : vector<2x128xf32>
    %112 = tpu.matmul %104, %2, %cst_25 {dimension_numbers = #tpu.dot_dimension_numbers<[1], [0], [0], [1], [0, 0, 1, 1], [], []>} : vector<2x32xbf16>, vector<32x128xbf16>, vector<2x128xf32> -> vector<2x128xf32>
    %113 = arith.addf %111, %112 : vector<2x128xf32>
    %114 = math.tanh %113 : vector<2x128xf32>
    %115 = vector.extract_strided_slice %114 {offsets = [0, 0], sizes = [2, 96], strides = [1, 1]} : vector<2x128xf32> to vector<2x96xf32>
    %cst_26 = arith.constant 5.000000e-01 : f32
    %116 = vector.broadcast %cst_26 : f32 to vector<2x96xf32>
    %117 = arith.mulf %116, %115 : vector<2x96xf32>
    %cst_27 = arith.constant 5.000000e-01 : f32
    %118 = vector.broadcast %cst_27 : f32 to vector<2x96xf32>
    %119 = arith.addf %117, %118 : vector<2x96xf32>
    %120 = vector.extract_strided_slice %119 {offsets = [0, 0], sizes = [2, 32], strides = [1, 1]} : vector<2x96xf32> to vector<2x32xf32>
    %121 = vector.extract_strided_slice %119 {offsets = [0, 32], sizes = [2, 32], strides = [1, 1]} : vector<2x96xf32> to vector<2x32xf32>
    %122 = vector.extract_strided_slice %119 {offsets = [0, 64], sizes = [2, 32], strides = [1, 1]} : vector<2x96xf32> to vector<2x32xf32>
    %123 = vector.extract_strided_slice %114 {offsets = [0, 96], sizes = [2, 32], strides = [1, 1]} : vector<2x128xf32> to vector<2x32xf32>
    %124 = arith.mulf %121, %101 : vector<2x32xf32>
    %125 = arith.mulf %120, %123 : vector<2x32xf32>
    %126 = arith.addf %124, %125 : vector<2x32xf32>
    %127 = math.tanh %126 : vector<2x32xf32>
    %128 = arith.mulf %122, %127 : vector<2x32xf32>
    %129 = arith.truncf %128 : vector<2x32xf32> to vector<2x32xbf16>
    %c0_28 = arith.constant 0 : index
    %c128 = arith.constant 128 : index
    %130 = vector.load %arg12[%c0_28, %c128] : memref<2x256xbf16, #tpu.memory_space<vmem>>, vector<2x32xbf16>
    tpu.vector_store %arg12[%c0_28, %c128], %129 {strides = array<i32>} : memref<2x256xbf16, #tpu.memory_space<vmem>>, vector<2x32xbf16>,
    %131 = vector.extract_strided_slice %0 {offsets = [0, 5], sizes = [2, 1], strides = [1, 1]} : vector<2x8xf32> to vector<2x1xf32>
    %132 = vector.broadcast %131 : vector<2x1xf32> to vector<2x128xf32>
    %133 = vector.broadcast %1 : vector<1x128xf32> to vector<2x128xf32>
    %134 = arith.mulf %132, %133 : vector<2x128xf32>
    %135 = vector.broadcast %3 : vector<1x128xf32> to vector<2x128xf32>
    %136 = arith.addf %134, %135 : vector<2x128xf32>
    %cst_29 = arith.constant dense<0.000000e+00> : vector<2x128xf32>
    %137 = tpu.matmul %129, %2, %cst_29 {dimension_numbers = #tpu.dot_dimension_numbers<[1], [0], [0], [1], [0, 0, 1, 1], [], []>} : vector<2x32xbf16>, vector<32x128xbf16>, vector<2x128xf32> -> vector<2x128xf32>
    %138 = arith.addf %136, %137 : vector<2x128xf32>
    %139 = math.tanh %138 : vector<2x128xf32>
    %140 = vector.extract_strided_slice %139 {offsets = [0, 0], sizes = [2, 96], strides = [1, 1]} : vector<2x128xf32> to vector<2x96xf32>
    %cst_30 = arith.constant 5.000000e-01 : f32
    %141 = vector.broadcast %cst_30 : f32 to vector<2x96xf32>
    %142 = arith.mulf %141, %140 : vector<2x96xf32>
    %cst_31 = arith.constant 5.000000e-01 : f32
    %143 = vector.broadcast %cst_31 : f32 to vector<2x96xf32>
    %144 = arith.addf %142, %143 : vector<2x96xf32>
    %145 = vector.extract_strided_slice %144 {offsets = [0, 0], sizes = [2, 32], strides = [1, 1]} : vector<2x96xf32> to vector<2x32xf32>
    %146 = vector.extract_strided_slice %144 {offsets = [0, 32], sizes = [2, 32], strides = [1, 1]} : vector<2x96xf32> to vector<2x32xf32>
    %147 = vector.extract_strided_slice %144 {offsets = [0, 64], sizes = [2, 32], strides = [1, 1]} : vector<2x96xf32> to vector<2x32xf32>
    %148 = vector.extract_strided_slice %139 {offsets = [0, 96], sizes = [2, 32], strides = [1, 1]} : vector<2x128xf32> to vector<2x32xf32>
    %149 = arith.mulf %146, %126 : vector<2x32xf32>
    %150 = arith.mulf %145, %148 : vector<2x32xf32>
    %151 = arith.addf %149, %150 : vector<2x32xf32>
    %152 = math.tanh %151 : vector<2x32xf32>
    %153 = arith.mulf %147, %152 : vector<2x32xf32>
    %154 = arith.truncf %153 : vector<2x32xf32> to vector<2x32xbf16>
    %c0_32 = arith.constant 0 : index
    %c160 = arith.constant 160 : index
    %155 = vector.load %arg12[%c0_32, %c160] : memref<2x256xbf16, #tpu.memory_space<vmem>>, vector<2x32xbf16>
    tpu.vector_store %arg12[%c0_32, %c160], %154 {strides = array<i32>} : memref<2x256xbf16, #tpu.memory_space<vmem>>, vector<2x32xbf16>,
    %156 = vector.extract_strided_slice %0 {offsets = [0, 6], sizes = [2, 1], strides = [1, 1]} : vector<2x8xf32> to vector<2x1xf32>
    %157 = vector.broadcast %156 : vector<2x1xf32> to vector<2x128xf32>
    %158 = vector.broadcast %1 : vector<1x128xf32> to vector<2x128xf32>
    %159 = arith.mulf %157, %158 : vector<2x128xf32>
    %160 = vector.broadcast %3 : vector<1x128xf32> to vector<2x128xf32>
    %161 = arith.addf %159, %160 : vector<2x128xf32>
    %cst_33 = arith.constant dense<0.000000e+00> : vector<2x128xf32>
    %162 = tpu.matmul %154, %2, %cst_33 {dimension_numbers = #tpu.dot_dimension_numbers<[1], [0], [0], [1], [0, 0, 1, 1], [], []>} : vector<2x32xbf16>, vector<32x128xbf16>, vector<2x128xf32> -> vector<2x128xf32>
    %163 = arith.addf %161, %162 : vector<2x128xf32>
    %164 = math.tanh %163 : vector<2x128xf32>
    %165 = vector.extract_strided_slice %164 {offsets = [0, 0], sizes = [2, 96], strides = [1, 1]} : vector<2x128xf32> to vector<2x96xf32>
    %cst_34 = arith.constant 5.000000e-01 : f32
    %166 = vector.broadcast %cst_34 : f32 to vector<2x96xf32>
    %167 = arith.mulf %166, %165 : vector<2x96xf32>
    %cst_35 = arith.constant 5.000000e-01 : f32
    %168 = vector.broadcast %cst_35 : f32 to vector<2x96xf32>
    %169 = arith.addf %167, %168 : vector<2x96xf32>
    %170 = vector.extract_strided_slice %169 {offsets = [0, 0], sizes = [2, 32], strides = [1, 1]} : vector<2x96xf32> to vector<2x32xf32>
    %171 = vector.extract_strided_slice %169 {offsets = [0, 32], sizes = [2, 32], strides = [1, 1]} : vector<2x96xf32> to vector<2x32xf32>
    %172 = vector.extract_strided_slice %169 {offsets = [0, 64], sizes = [2, 32], strides = [1, 1]} : vector<2x96xf32> to vector<2x32xf32>
    %173 = vector.extract_strided_slice %164 {offsets = [0, 96], sizes = [2, 32], strides = [1, 1]} : vector<2x128xf32> to vector<2x32xf32>
    %174 = arith.mulf %171, %151 : vector<2x32xf32>
    %175 = arith.mulf %170, %173 : vector<2x32xf32>
    %176 = arith.addf %174, %175 : vector<2x32xf32>
    %177 = math.tanh %176 : vector<2x32xf32>
    %178 = arith.mulf %172, %177 : vector<2x32xf32>
    %179 = arith.truncf %178 : vector<2x32xf32> to vector<2x32xbf16>
    %c0_36 = arith.constant 0 : index
    %c192 = arith.constant 192 : index
    %180 = vector.load %arg12[%c0_36, %c192] : memref<2x256xbf16, #tpu.memory_space<vmem>>, vector<2x32xbf16>
    tpu.vector_store %arg12[%c0_36, %c192], %179 {strides = array<i32>} : memref<2x256xbf16, #tpu.memory_space<vmem>>, vector<2x32xbf16>,
    %181 = vector.extract_strided_slice %0 {offsets = [0, 7], sizes = [2, 1], strides = [1, 1]} : vector<2x8xf32> to vector<2x1xf32>
    %182 = vector.broadcast %181 : vector<2x1xf32> to vector<2x128xf32>
    %183 = vector.broadcast %1 : vector<1x128xf32> to vector<2x128xf32>
    %184 = arith.mulf %182, %183 : vector<2x128xf32>
    %185 = vector.broadcast %3 : vector<1x128xf32> to vector<2x128xf32>
    %186 = arith.addf %184, %185 : vector<2x128xf32>
    %cst_37 = arith.constant dense<0.000000e+00> : vector<2x128xf32>
    %187 = tpu.matmul %179, %2, %cst_37 {dimension_numbers = #tpu.dot_dimension_numbers<[1], [0], [0], [1], [0, 0, 1, 1], [], []>} : vector<2x32xbf16>, vector<32x128xbf16>, vector<2x128xf32> -> vector<2x128xf32>
    %188 = arith.addf %186, %187 : vector<2x128xf32>
    %189 = math.tanh %188 : vector<2x128xf32>
    %190 = vector.extract_strided_slice %189 {offsets = [0, 0], sizes = [2, 96], strides = [1, 1]} : vector<2x128xf32> to vector<2x96xf32>
    %cst_38 = arith.constant 5.000000e-01 : f32
    %191 = vector.broadcast %cst_38 : f32 to vector<2x96xf32>
    %192 = arith.mulf %191, %190 : vector<2x96xf32>
    %cst_39 = arith.constant 5.000000e-01 : f32
    %193 = vector.broadcast %cst_39 : f32 to vector<2x96xf32>
    %194 = arith.addf %192, %193 : vector<2x96xf32>
    %195 = vector.extract_strided_slice %194 {offsets = [0, 0], sizes = [2, 32], strides = [1, 1]} : vector<2x96xf32> to vector<2x32xf32>
    %196 = vector.extract_strided_slice %194 {offsets = [0, 32], sizes = [2, 32], strides = [1, 1]} : vector<2x96xf32> to vector<2x32xf32>
    %197 = vector.extract_strided_slice %194 {offsets = [0, 64], sizes = [2, 32], strides = [1, 1]} : vector<2x96xf32> to vector<2x32xf32>
    %198 = vector.extract_strided_slice %189 {offsets = [0, 96], sizes = [2, 32], strides = [1, 1]} : vector<2x128xf32> to vector<2x32xf32>
    %199 = arith.mulf %196, %176 : vector<2x32xf32>
    %200 = arith.mulf %195, %198 : vector<2x32xf32>
    %201 = arith.addf %199, %200 : vector<2x32xf32>
    %202 = math.tanh %201 : vector<2x32xf32>
    %203 = arith.mulf %197, %202 : vector<2x32xf32>
    %204 = arith.truncf %203 : vector<2x32xf32> to vector<2x32xbf16>
    %c0_40 = arith.constant 0 : index
    %c224 = arith.constant 224 : index
    %205 = vector.load %arg12[%c0_40, %c224] : memref<2x256xbf16, #tpu.memory_space<vmem>>, vector<2x32xbf16>
    tpu.vector_store %arg12[%c0_40, %c224], %204 {strides = array<i32>} : memref<2x256xbf16, #tpu.memory_space<vmem>>, vector<2x32xbf16>,
    %c0_41 = arith.constant 0 : index
    %c0_42 = arith.constant 0 : index
    %206 = vector.load %arg12[%c0_41, %c0_42] : memref<2x256xbf16, #tpu.memory_space<vmem>>, vector<2x256xbf16>
    %c0_43 = arith.constant 0 : index
    %c0_44 = arith.constant 0 : index
    %207 = vector.load %arg5[%c0_43, %c0_44] : memref<256x32xbf16, #tpu.memory_space<vmem>>, vector<256x32xbf16>
    %cst_45 = arith.constant dense<0.000000e+00> : vector<2x32xf32>
    %208 = tpu.matmul %206, %207, %cst_45 {dimension_numbers = #tpu.dot_dimension_numbers<[1], [0], [0], [1], [0, 0, 1, 1], [], []>} : vector<2x256xbf16>, vector<256x32xbf16>, vector<2x32xf32> -> vector<2x32xf32>
    %c0_46 = arith.constant 0 : index
    %c0_47 = arith.constant 0 : index
    %209 = vector.load %arg6[%c0_46, %c0_47] : memref<1x32xf32, #tpu.memory_space<vmem>>, vector<1x32xf32>
    %210 = vector.broadcast %209 : vector<1x32xf32> to vector<2x32xf32>
    %211 = arith.addf %208, %210 : vector<2x32xf32>
    %cst_48 = arith.constant 0.000000e+00 : f32
    %212 = vector.broadcast %cst_48 : f32 to vector<2x32xf32>
    %213 = arith.maximumf %211, %212 : vector<2x32xf32>
    %214 = arith.truncf %213 : vector<2x32xf32> to vector<2x32xbf16>
    %c0_49 = arith.constant 0 : index
    %c0_50 = arith.constant 0 : index
    %215 = vector.load %arg7[%c0_49, %c0_50] : memref<32x16xbf16, #tpu.memory_space<vmem>>, vector<32x16xbf16>
    %cst_51 = arith.constant dense<0.000000e+00> : vector<2x16xf32>
    %216 = tpu.matmul %214, %215, %cst_51 {dimension_numbers = #tpu.dot_dimension_numbers<[1], [0], [0], [1], [0, 0, 1, 1], [], []>} : vector<2x32xbf16>, vector<32x16xbf16>, vector<2x16xf32> -> vector<2x16xf32>
    %c0_52 = arith.constant 0 : index
    %c0_53 = arith.constant 0 : index
    %217 = vector.load %arg8[%c0_52, %c0_53] : memref<1x16xf32, #tpu.memory_space<vmem>>, vector<1x16xf32>
    %218 = vector.broadcast %217 : vector<1x16xf32> to vector<2x16xf32>
    %219 = arith.addf %216, %218 : vector<2x16xf32>
    %cst_54 = arith.constant 0.000000e+00 : f32
    %220 = vector.broadcast %cst_54 : f32 to vector<2x16xf32>
    %221 = arith.maximumf %219, %220 : vector<2x16xf32>
    %222 = arith.truncf %221 : vector<2x16xf32> to vector<2x16xbf16>
    %c0_55 = arith.constant 0 : index
    %c0_56 = arith.constant 0 : index
    %223 = vector.load %arg9[%c0_55, %c0_56] : memref<16x5xbf16, #tpu.memory_space<vmem>>, vector<16x5xbf16>
    %cst_57 = arith.constant dense<0.000000e+00> : vector<2x5xf32>
    %224 = tpu.matmul %222, %223, %cst_57 {dimension_numbers = #tpu.dot_dimension_numbers<[1], [0], [0], [1], [0, 0, 1, 1], [], []>} : vector<2x16xbf16>, vector<16x5xbf16>, vector<2x5xf32> -> vector<2x5xf32>
    %c0_58 = arith.constant 0 : index
    %c0_59 = arith.constant 0 : index
    %225 = vector.load %arg10[%c0_58, %c0_59] : memref<1x5xf32, #tpu.memory_space<vmem>>, vector<1x5xf32>
    %226 = vector.broadcast %225 : vector<1x5xf32> to vector<2x5xf32>
    %227 = arith.addf %224, %226 : vector<2x5xf32>
    %c0_60 = arith.constant 0 : index
    %c0_61 = arith.constant 0 : index
    %228 = vector.load %arg11[%c0_60, %c0_61] : memref<2x5xf32, #tpu.memory_space<vmem>>, vector<2x5xf32>
    tpu.vector_store %arg11[%c0_60, %c0_61], %227 {strides = array<i32>} : memref<2x5xf32, #tpu.memory_space<vmem>>, vector<2x5xf32>,
    return
  }
  func.func @transform_0(%arg0: i32) -> (i32, i32) {
    %c0_i32 = arith.constant 0 : i32
    %c0_i32_0 = arith.constant 0 : i32
    return %arg0, %c0_i32 : i32, i32
  }
  func.func @transform_1(%arg0: i32) -> (i32, i32) {
    %c0_i32 = arith.constant 0 : i32
    %c0_i32_0 = arith.constant 0 : i32
    %c0_i32_1 = arith.constant 0 : i32
    return %c0_i32, %c0_i32_0 : i32, i32
  }
  func.func @transform_2(%arg0: i32) -> (i32, i32) {
    %c0_i32 = arith.constant 0 : i32
    %c0_i32_0 = arith.constant 0 : i32
    %c0_i32_1 = arith.constant 0 : i32
    return %c0_i32, %c0_i32_0 : i32, i32
  }
  func.func @transform_3(%arg0: i32) -> (i32, i32) {
    %c0_i32 = arith.constant 0 : i32
    %c0_i32_0 = arith.constant 0 : i32
    %c0_i32_1 = arith.constant 0 : i32
    return %c0_i32, %c0_i32_0 : i32, i32
  }
  func.func @transform_4(%arg0: i32) -> (i32, i32) {
    %c0_i32 = arith.constant 0 : i32
    %c0_i32_0 = arith.constant 0 : i32
    %c0_i32_1 = arith.constant 0 : i32
    return %c0_i32, %c0_i32_0 : i32, i32
  }
  func.func @transform_5(%arg0: i32) -> (i32, i32) {
    %c0_i32 = arith.constant 0 : i32
    %c0_i32_0 = arith.constant 0 : i32
    %c0_i32_1 = arith.constant 0 : i32
    return %c0_i32, %c0_i32_0 : i32, i32
  }
  func.func @transform_6(%arg0: i32) -> (i32, i32) {
    %c0_i32 = arith.constant 0 : i32
    %c0_i32_0 = arith.constant 0 : i32
    %c0_i32_1 = arith.constant 0 : i32
    return %c0_i32, %c0_i32_0 : i32, i32
  }
  func.func @transform_7(%arg0: i32) -> (i32, i32) {
    %c0_i32 = arith.constant 0 : i32
    %c0_i32_0 = arith.constant 0 : i32
    %c0_i32_1 = arith.constant 0 : i32
    return %c0_i32, %c0_i32_0 : i32, i32
  }
  func.func @transform_8(%arg0: i32) -> (i32, i32) {
    %c0_i32 = arith.constant 0 : i32
    %c0_i32_0 = arith.constant 0 : i32
    %c0_i32_1 = arith.constant 0 : i32
    return %c0_i32, %c0_i32_0 : i32, i32
  }
  func.func @transform_9(%arg0: i32) -> (i32, i32) {
    %c0_i32 = arith.constant 0 : i32
    %c0_i32_0 = arith.constant 0 : i32
    %c0_i32_1 = arith.constant 0 : i32
    return %c0_i32, %c0_i32_0 : i32, i32
  }
  func.func @transform_10(%arg0: i32) -> (i32, i32) {
    %c0_i32 = arith.constant 0 : i32
    %c0_i32_0 = arith.constant 0 : i32
    return %arg0, %c0_i32 : i32, i32
  }
}

</mosaic_0001>

<llo_original>
// kernel: tpu_custom_call.1
$region0: #{tpu_custom_call.1}
  #allocation0 [shape = 'u32[]', space=smem, size = 0x4, offset = 0x4, fixed_abs, tag = 'smem constant byte address 0x4 - core index']
  #allocation1 [shape = 'u32[144,128]{1,0:T(1,128)}', space=vmem, size = 0x12000, scoped, tag = 'internal scratch']
  #allocation2 [shape = 'bf16[2,256]{1,0:T(2,128)(2,1)}', space=vmem, size = 0x400, scoped, tag = 'scratch operand']
  %s0 = inlined_call_operand.vmem [shape: f32[2,8], index: 0, kind: input, shape index: {}]
  %s1 = inlined_call_operand.vmem [shape: f32[1,128], index: 1, kind: input, shape index: {}]
  %s2 = inlined_call_operand.vmem [shape: bf16[32,128], index: 2, kind: input, shape index: {}]
  %s3 = inlined_call_operand.vmem [shape: f32[1,128], index: 3, kind: input, shape index: {}]
  %s4 = inlined_call_operand.vmem [shape: bf16[256,32], index: 4, kind: input, shape index: {}]
  %s5 = inlined_call_operand.vmem [shape: f32[1,32], index: 5, kind: input, shape index: {}]
  %s6 = inlined_call_operand.vmem [shape: bf16[32,16], index: 6, kind: input, shape index: {}]
  %s7 = inlined_call_operand.vmem [shape: f32[1,16], index: 7, kind: input, shape index: {}]
  %s8 = inlined_call_operand.vmem [shape: bf16[16,5], index: 8, kind: input, shape index: {}]
  %s9 = inlined_call_operand.vmem [shape: f32[1,5], index: 9, kind: input, shape index: {}]
  %s10 = inlined_call_operand.hbm [shape: f32[2,5], index: 10, kind: output, shape index: {}]
  %s11 = sld [smem:[#allocation0]]
  $region50: #{tpu_custom_call.1} parent=0
    _
  %s13 = ssub.s32 1, %s11
  %s14 = scalar_select 0, %s13, %s11
  $region1: #{tpu_custom_call.1} parent=0
    #allocation3 [shape = 'u8[1024]{0}', space=vmem, size = 0x400, scoped, tag = 'output window, operand 0, single buffered']
    #allocation4 [shape = 's32[1]{0}', space=sflag, size = 0x4, scoped, tag = 'scoped memory for tpu_custom_call.1']
    %15 = vsyncpa [#allocation4], 0
    // Predicated region
    $region2: #{tpu_custom_call.1} parent=1 // pred_check
      _
    $region3: #{tpu_custom_call.1} parent=1 // pred_check_branch
      %17 = sbr.rel (0) target = $region5
    $region4: #{tpu_custom_call.1} parent=1 // pred_region
      _
    $region5: #{tpu_custom_call.1} parent=1 // pred_fallthru
      _
    // Predicated region
    $region6: #{tpu_custom_call.1} parent=1 // pred_check
      _
    $region7: #{tpu_custom_call.1} parent=1 // pred_check_branch
      %19 = sbr.rel (0) target = $region9
    $region8: #{tpu_custom_call.1} parent=1 // pred_region
      _
    $region9: #{tpu_custom_call.1} parent=1 // pred_fallthru
      _
    // Predicated region
    $region10: #{tpu_custom_call.1} parent=1 // pred_check
      _
    $region11: #{tpu_custom_call.1} parent=1 // pred_check_branch
      %21 = sbr.rel (0) target = $region13
    $region12: #{tpu_custom_call.1} parent=1 // pred_region
      _
    $region13: #{tpu_custom_call.1} parent=1 // pred_fallthru
      _
    // Predicated region
    $region14: #{tpu_custom_call.1} parent=1 // pred_check
      _
    $region15: #{tpu_custom_call.1} parent=1 // pred_check_branch
      %23 = sbr.rel (0) target = $region17
    $region16: #{tpu_custom_call.1} parent=1 // pred_region
      _
    $region17: #{tpu_custom_call.1} parent=1 // pred_fallthru
      _
    // Predicated region
    $region18: #{tpu_custom_call.1} parent=1 // pred_check
      _
    $region19: #{tpu_custom_call.1} parent=1 // pred_check_branch
      %25 = sbr.rel (0) target = $region21
    $region20: #{tpu_custom_call.1} parent=1 // pred_region
      _
    $region21: #{tpu_custom_call.1} parent=1 // pred_fallthru
      _
    // Predicated region
    $region22: #{tpu_custom_call.1} parent=1 // pred_check
      _
    $region23: #{tpu_custom_call.1} parent=1 // pred_check_branch
      %27 = sbr.rel (0) target = $region25
    $region24: #{tpu_custom_call.1} parent=1 // pred_region
      _
    $region25: #{tpu_custom_call.1} parent=1 // pred_fallthru
      _
    // Predicated region
    $region26: #{tpu_custom_call.1} parent=1 // pred_check
      _
    $region27: #{tpu_custom_call.1} parent=1 // pred_check_branch
      %29 = sbr.rel (0) target = $region29
    $region28: #{tpu_custom_call.1} parent=1 // pred_region
      _
    $region29: #{tpu_custom_call.1} parent=1 // pred_fallthru
      _
    // Predicated region
    $region30: #{tpu_custom_call.1} parent=1 // pred_check
      _
    $region31: #{tpu_custom_call.1} parent=1 // pred_check_branch
      %31 = sbr.rel (0) target = $region33
    $region32: #{tpu_custom_call.1} parent=1 // pred_region
      _
    $region33: #{tpu_custom_call.1} parent=1 // pred_fallthru
      _
    // Predicated region
    $region34: #{tpu_custom_call.1} parent=1 // pred_check
      _
    $region35: #{tpu_custom_call.1} parent=1 // pred_check_branch
      %33 = sbr.rel (0) target = $region37
    $region36: #{tpu_custom_call.1} parent=1 // pred_region
      _
    $region37: #{tpu_custom_call.1} parent=1 // pred_fallthru
      _
    // Predicated region
    $region38: #{tpu_custom_call.1} parent=1 // pred_check
      _
    $region39: #{tpu_custom_call.1} parent=1 // pred_check_branch
      %35 = sbr.rel (0) target = $region41
    $region40: #{tpu_custom_call.1} parent=1 // pred_region
      _
    $region41: #{tpu_custom_call.1} parent=1 // pred_fallthru
      _
    %v37 = vld [vmem:[%s0] sm:$0x3]
    %v38 = vld [vmem:[%s1] sm:$0x1]
    %v39 = vld [vmem:[%s2] sm:$0xf]
    %v40 = vld [vmem:[%s2 + $0x4] sm:$0xf]
    %v41 = vld [vmem:[%s2 + $0x8] sm:$0xf]
    %v42 = vld [vmem:[%s2 + $0xc] sm:$0xf]
    %v43 = vld [vmem:[%s3] sm:$0x1]
    %45 = vset.pattern.permute.xlu0 0
    %46 = vperm.xlu0 %45, %v37
    %v47 = vpop.permute.xlu0 %46
    %v50 = vlaneseq
    %v51 = vshrl.u32 %v50, 7
    %v52 = vsub.s32 0, %v51
    %v53 = vrot.slane %v38, %v52
    %v55 = vmul.f32 %v47, %v53
    %v57 = vlaneseq
    %v58 = vshrl.u32 %v57, 7
    %v59 = vsub.s32 0, %v58
    %v60 = vrot.slane %v43, %v59
    %v62 = vadd.f32 %v55, %v60
    %v67 = vunpack.c.l.b16 %v39
    %v68 = vunpack.c.l.b16 %v40
    %v69 = vunpack.c.l.b16 %v41
    %v70 = vunpack.c.l.b16 %v42
    %v71 = vpack.c.b16 %v68, %v67
    %v72 = vpack.c.b16 %v70, %v69
    %vm75 = vcmask 261120
    %v77 = vsel %vm75, 0, 0
    %79 = vmatprep.subr.bf16.mxu0 0
    %80 = vmatpush1.bf16.msra.mxu0 %v71
    %81 = vmatprep.subr.bf16.mxu0 0
    %82 = vmatpush1.bf16.msra.mxu0 %v72
    %83 = vmatprep.subr.bf16.mxu0 0
    %84 = vmatpush1.bf16.msra.mxu0 0
    %85 = vmatprep.subr.bf16.mxu0 0
    %86 = vmatpush1.bf16.msra.mxu0 0
    %87 = vmatprep.subr.bf16.mxu0 0
    %88 = vmatpush1.bf16.msra.mxu0 0
    %89 = vmatprep.subr.bf16.mxu0 0
    %90 = vmatpush1.bf16.msra.mxu0 0
    %91 = vmatprep.subr.bf16.mxu0 0
    %92 = vmatpush1.bf16.msra.mxu0 0
    %93 = vmatprep.subr.bf16.mxu0 0
    %94 = vmatpush1.bf16.msra.mxu0 0
    %95 = vmatprep.subr.bf16.mxu0 0
    %96 = vmatpush1.bf16.msra.mxu0 0
    %97 = vmatprep.subr.bf16.mxu0 0
    %98 = vmatpush1.bf16.msra.mxu0 0
    %99 = vmatprep.subr.bf16.mxu0 0
    %100 = vmatpush1.bf16.msra.mxu0 0
    %101 = vmatprep.subr.bf16.mxu0 0
    %102 = vmatpush1.bf16.msra.mxu0 0
    %103 = vmatprep.subr.bf16.mxu0 0
    %104 = vmatpush1.bf16.msra.mxu0 0
    %105 = vmatprep.subr.bf16.mxu0 0
    %106 = vmatpush1.bf16.msra.mxu0 0
    %107 = vmatprep.subr.bf16.mxu0 0
    %108 = vmatpush1.bf16.msra.mxu0 0
    %109 = vmatprep.subr.bf16.mxu0 0
    %110 = vmatpush1.bf16.msra.mxu0 0
    %111 = vmatprep.mubr.bf16.mxu0 0
    %112 = vmatmul.mubr.bf16.gmra.mrb[0].mxu0 %v77
    %v113 = vpop.f32.mrb[0].mxu0
    %v114 = vadd.f32 0.0, %v113
    %v115 = vpop.f32.mrb[0].mxu0
    %v116 = vpop.f32.mrb[0].mxu0
    %v117 = vpop.f32.mrb[0].mxu0
    %118 = vdwg.mxu0
    %v119 = vadd.f32 %v62, %v114
    %v120 = vtanh.pop %v119
    %v121 = vmul.f32 %v120, 0.5
    %v122 = vadd.f32 %v121, 0.5
    %v123 = vmul.f32 %v122, 0.0
    %125 = vrot.lane.b32.xlu0 %v120, 32
    %v126 = vpop.permute.xlu0 %125
    %v128 = vmul.f32 %v122, %v126
    %130 = vrot.lane.b32.xlu0 %v128, 32
    %v131 = vpop.permute.xlu0 %130
    %v133 = vadd.f32 %v123, %v131
    %v134 = vtanh.pop %v133
    %136 = vrot.lane.b32.xlu0 %v134, 32
    %v137 = vpop.permute.xlu0 %136
    %v139 = vmul.f32 %v122, %v137
    %v140 = vpack.c.bf16 %v139, %v139
    %v143 = vunpack.c.l.s4 1966171168
    %v144 = vunpack.c.0.s8 %v143
    %v145 = vlaneseq
    %v146 = vshrl.u32 %v145, 7
    %v147 = vsub.s32 %v144, %v146
    %v148 = vrot.slane %v140, %v147
    %v150 = vunpack.c.l.s4 1966171168
    %v151 = vunpack.c.0.s8 %v150
    %v152 = vlaneseq
    %v153 = vshrl.u32 %v152, 7
    %v154 = vsub.s32 %v151, %v153
    %v155 = vrot.slane %v148, %v154
    %156 = vrot.lane.b32.xlu0 %v155, 64
    %v157 = vpop.permute.xlu0 %156
    %vm159 = vcmask 253952
    %160 = vst.msk [vmem:[#allocation2] sm:$0x1] %vm159, %v157
    %161 = vset.pattern.permute.xlu0 1
    %162 = vperm.xlu0 %161, %v37
    %v163 = vpop.permute.xlu0 %162
    %v165 = vmul.f32 %v163, %v53
    %v166 = vadd.f32 %v165, %v60
    %167 = vrot.lane.b32.xlu0 %v140, 64
    %v168 = vpop.permute.xlu0 %167
    %v170 = vsel %vm75, %v168, 0
    %172 = vmatprep.subr.bf16.mxu0 0
    %173 = vmatpush1.bf16.msra.mxu0 %v71
    %174 = vmatprep.subr.bf16.mxu0 0
    %175 = vmatpush1.bf16.msra.mxu0 %v72
    %176 = vmatprep.subr.bf16.mxu0 0
    %177 = vmatpush1.bf16.msra.mxu0 0
    %178 = vmatprep.subr.bf16.mxu0 0
    %179 = vmatpush1.bf16.msra.mxu0 0
    %180 = vmatprep.subr.bf16.mxu0 0
    %181 = vmatpush1.bf16.msra.mxu0 0
    %182 = vmatprep.subr.bf16.mxu0 0
    %183 = vmatpush1.bf16.msra.mxu0 0
    %184 = vmatprep.subr.bf16.mxu0 0
    %185 = vmatpush1.bf16.msra.mxu0 0
    %186 = vmatprep.subr.bf16.mxu0 0
    %187 = vmatpush1.bf16.msra.mxu0 0
    %188 = vmatprep.subr.bf16.mxu0 0
    %189 = vmatpush1.bf16.msra.mxu0 0
    %190 = vmatprep.subr.bf16.mxu0 0
    %191 = vmatpush1.bf16.msra.mxu0 0
    %192 = vmatprep.subr.bf16.mxu0 0
    %193 = vmatpush1.bf16.msra.mxu0 0
    %194 = vmatprep.subr.bf16.mxu0 0
    %195 = vmatpush1.bf16.msra.mxu0 0
    %196 = vmatprep.subr.bf16.mxu0 0
    %197 = vmatpush1.bf16.msra.mxu0 0
    %198 = vmatprep.subr.bf16.mxu0 0
    %199 = vmatpush1.bf16.msra.mxu0 0
    %200 = vmatprep.subr.bf16.mxu0 0
    %201 = vmatpush1.bf16.msra.mxu0 0
    %202 = vmatprep.subr.bf16.mxu0 0
    %203 = vmatpush1.bf16.msra.mxu0 0
    %204 = vmatprep.mubr.bf16.mxu0 0
    %205 = vmatmul.mubr.bf16.gmra.mrb[0].mxu0 %v170
    %v206 = vpop.f32.mrb[0].mxu0
    %v207 = vadd.f32 0.0, %v206
    %v208 = vpop.f32.mrb[0].mxu0
    %v209 = vpop.f32.mrb[0].mxu0
    %v210 = vpop.f32.mrb[0].mxu0
    %211 = vdwg.mxu0
    %v212 = vadd.f32 %v166, %v207
    %v213 = vtanh.pop %v212
    %v214 = vmul.f32 %v213, 0.5
    %v215 = vadd.f32 %v214, 0.5
    %v216 = vmul.f32 %v215, %v133
    %218 = vrot.lane.b32.xlu0 %v213, 32
    %v219 = vpop.permute.xlu0 %218
    %v221 = vmul.f32 %v215, %v219
    %223 = vrot.lane.b32.xlu0 %v221, 32
    %v224 = vpop.permute.xlu0 %223
    %v226 = vadd.f32 %v216, %v224
    %v227 = vtanh.pop %v226
    %229 = vrot.lane.b32.xlu0 %v227, 32
    %v230 = vpop.permute.xlu0 %229
    %v232 = vmul.f32 %v215, %v230
    %v233 = vpack.c.bf16 %v232, %v232
    %v236 = vunpack.c.l.s4 1966171168
    %v237 = vunpack.c.0.s8 %v236
    %v238 = vlaneseq
    %v239 = vshrl.u32 %v238, 7
    %v240 = vsub.s32 %v237, %v239
    %v241 = vrot.slane %v233, %v240
    %v243 = vunpack.c.l.s4 1966171168
    %v244 = vunpack.c.0.s8 %v243
    %v245 = vlaneseq
    %v246 = vshrl.u32 %v245, 7
    %v247 = vsub.s32 %v244, %v246
    %v248 = vrot.slane %v241, %v247
    %249 = vrot.lane.b32.xlu0 %v248, 96
    %v250 = vpop.permute.xlu0 %249
    %vm252 = vcmask 516352
    %253 = vst.msk [vmem:[#allocation2] sm:$0x1] %vm252, %v250
    %254 = vset.pattern.permute.xlu0 2
    %255 = vperm.xlu0 %254, %v37
    %v256 = vpop.permute.xlu0 %255
    %v258 = vmul.f32 %v256, %v53
    %v259 = vadd.f32 %v258, %v60
    %260 = vrot.lane.b32.xlu0 %v233, 64
    %v261 = vpop.permute.xlu0 %260
    %v263 = vsel %vm75, %v261, 0
    %265 = vmatprep.subr.bf16.mxu0 0
    %266 = vmatpush1.bf16.msra.mxu0 %v71
    %267 = vmatprep.subr.bf16.mxu0 0
    %268 = vmatpush1.bf16.msra.mxu0 %v72
    %269 = vmatprep.subr.bf16.mxu0 0
    %270 = vmatpush1.bf16.msra.mxu0 0
    %271 = vmatprep.subr.bf16.mxu0 0
    %272 = vmatpush1.bf16.msra.mxu0 0
    %273 = vmatprep.subr.bf16.mxu0 0
    %274 = vmatpush1.bf16.msra.mxu0 0
    %275 = vmatprep.subr.bf16.mxu0 0
    %276 = vmatpush1.bf16.msra.mxu0 0
    %277 = vmatprep.subr.bf16.mxu0 0
    %278 = vmatpush1.bf16.msra.mxu0 0
    %279 = vmatprep.subr.bf16.mxu0 0
    %280 = vmatpush1.bf16.msra.mxu0 0
    %281 = vmatprep.subr.bf16.mxu0 0
    %282 = vmatpush1.bf16.msra.mxu0 0
    %283 = vmatprep.subr.bf16.mxu0 0
    %284 = vmatpush1.bf16.msra.mxu0 0
    %285 = vmatprep.subr.bf16.mxu0 0
    %286 = vmatpush1.bf16.msra.mxu0 0
    %287 = vmatprep.subr.bf16.mxu0 0
    %288 = vmatpush1.bf16.msra.mxu0 0
    %289 = vmatprep.subr.bf16.mxu0 0
    %290 = vmatpush1.bf16.msra.mxu0 0
    %291 = vmatprep.subr.bf16.mxu0 0
    %292 = vmatpush1.bf16.msra.mxu0 0
    %293 = vmatprep.subr.bf16.mxu0 0
    %294 = vmatpush1.bf16.msra.mxu0 0
    %295 = vmatprep.subr.bf16.mxu0 0
    %296 = vmatpush1.bf16.msra.mxu0 0
    %297 = vmatprep.mubr.bf16.mxu0 0
    %298 = vmatmul.mubr.bf16.gmra.mrb[0].mxu0 %v263
    %v299 = vpop.f32.mrb[0].mxu0
    %v300 = vadd.f32 0.0, %v299
    %v301 = vpop.f32.mrb[0].mxu0
    %v302 = vpop.f32.mrb[0].mxu0
    %v303 = vpop.f32.mrb[0].mxu0
    %304 = vdwg.mxu0
    %v305 = vadd.f32 %v259, %v300
    %v306 = vtanh.pop %v305
    %v307 = vmul.f32 %v306, 0.5
    %v308 = vadd.f32 %v307, 0.5
    %v309 = vmul.f32 %v308, %v226
    %311 = vrot.lane.b32.xlu0 %v306, 32
    %v312 = vpop.permute.xlu0 %311
    %v314 = vmul.f32 %v308, %v312
    %316 = vrot.lane.b32.xlu0 %v314, 32
    %v317 = vpop.permute.xlu0 %316
    %v319 = vadd.f32 %v309, %v317
    %v320 = vtanh.pop %v319
    %322 = vrot.lane.b32.xlu0 %v320, 32
    %v323 = vpop.permute.xlu0 %322
    %v325 = vmul.f32 %v308, %v323
    %v326 = vpack.c.bf16 %v325, %v325
    %vm327 = vcmask 778752
    %328 = vst.msk [vmem:[#allocation2] sm:$0x1] %vm327, %v326
    %329 = vset.pattern.permute.xlu0 3
    %330 = vperm.xlu0 %329, %v37
    %v331 = vpop.permute.xlu0 %330
    %v333 = vmul.f32 %v331, %v53
    %v334 = vadd.f32 %v333, %v60
    %336 = vrot.lane.b32.xlu0 %v326, 64
    %v337 = vpop.permute.xlu0 %336
    %v339 = vsel %vm75, %v337, 0
    %341 = vmatprep.subr.bf16.mxu0 0
    %342 = vmatpush1.bf16.msra.mxu0 %v71
    %343 = vmatprep.subr.bf16.mxu0 0
    %344 = vmatpush1.bf16.msra.mxu0 %v72
    %345 = vmatprep.subr.bf16.mxu0 0
    %346 = vmatpush1.bf16.msra.mxu0 0
    %347 = vmatprep.subr.bf16.mxu0 0
    %348 = vmatpush1.bf16.msra.mxu0 0
    %349 = vmatprep.subr.bf16.mxu0 0
    %350 = vmatpush1.bf16.msra.mxu0 0
    %351 = vmatprep.subr.bf16.mxu0 0
    %352 = vmatpush1.bf16.msra.mxu0 0
    %353 = vmatprep.subr.bf16.mxu0 0
    %354 = vmatpush1.bf16.msra.mxu0 0
    %355 = vmatprep.subr.bf16.mxu0 0
    %356 = vmatpush1.bf16.msra.mxu0 0
    %357 = vmatprep.subr.bf16.mxu0 0
    %358 = vmatpush1.bf16.msra.mxu0 0
    %359 = vmatprep.subr.bf16.mxu0 0
    %360 = vmatpush1.bf16.msra.mxu0 0
    %361 = vmatprep.subr.bf16.mxu0 0
    %362 = vmatpush1.bf16.msra.mxu0 0
    %363 = vmatprep.subr.bf16.mxu0 0
    %364 = vmatpush1.bf16.msra.mxu0 0
    %365 = vmatprep.subr.bf16.mxu0 0
    %366 = vmatpush1.bf16.msra.mxu0 0
    %367 = vmatprep.subr.bf16.mxu0 0
    %368 = vmatpush1.bf16.msra.mxu0 0
    %369 = vmatprep.subr.bf16.mxu0 0
    %370 = vmatpush1.bf16.msra.mxu0 0
    %371 = vmatprep.subr.bf16.mxu0 0
    %372 = vmatpush1.bf16.msra.mxu0 0
    %373 = vmatprep.mubr.bf16.mxu0 0
    %374 = vmatmul.mubr.bf16.gmra.mrb[0].mxu0 %v339
    %v375 = vpop.f32.mrb[0].mxu0
    %v376 = vadd.f32 0.0, %v375
    %v377 = vpop.f32.mrb[0].mxu0
    %v378 = vpop.f32.mrb[0].mxu0
    %v379 = vpop.f32.mrb[0].mxu0
    %380 = vdwg.mxu0
    %v381 = vadd.f32 %v334, %v376
    %v382 = vtanh.pop %v381
    %v383 = vmul.f32 %v382, 0.5
    %v384 = vadd.f32 %v383, 0.5
    %v385 = vmul.f32 %v384, %v319
    %387 = vrot.lane.b32.xlu0 %v382, 32
    %v388 = vpop.permute.xlu0 %387
    %v390 = vmul.f32 %v384, %v388
    %392 = vrot.lane.b32.xlu0 %v390, 32
    %v393 = vpop.permute.xlu0 %392
    %v395 = vadd.f32 %v385, %v393
    %v396 = vtanh.pop %v395
    %398 = vrot.lane.b32.xlu0 %v396, 32
    %v399 = vpop.permute.xlu0 %398
    %v401 = vmul.f32 %v384, %v399
    %v402 = vpack.c.bf16 %v401, %v401
    %v405 = vunpack.c.l.s4 1966171168
    %v406 = vunpack.c.0.s8 %v405
    %v407 = vlaneseq
    %v408 = vshrl.u32 %v407, 7
    %v409 = vsub.s32 %v406, %v408
    %v410 = vrot.slane %v402, %v409
    %v412 = vunpack.c.l.s4 1966171168
    %v413 = vunpack.c.0.s8 %v412
    %v414 = vlaneseq
    %v415 = vshrl.u32 %v414, 7
    %v416 = vsub.s32 %v413, %v415
    %v417 = vrot.slane %v410, %v416
    %418 = vrot.lane.b32.xlu0 %v417, 32
    %v419 = vpop.permute.xlu0 %418
    %vm421 = vcmask 1041152
    %422 = vst.msk [vmem:[#allocation2] sm:$0x1] %vm421, %v419
    %423 = vset.pattern.permute.xlu0 4
    %424 = vperm.xlu0 %423, %v37
    %v425 = vpop.permute.xlu0 %424
    %v427 = vmul.f32 %v425, %v53
    %v428 = vadd.f32 %v427, %v60
    %429 = vrot.lane.b32.xlu0 %v402, 64
    %v430 = vpop.permute.xlu0 %429
    %v432 = vsel %vm75, %v430, 0
    %434 = vmatprep.subr.bf16.mxu0 0
    %435 = vmatpush1.bf16.msra.mxu0 %v71
    %436 = vmatprep.subr.bf16.mxu0 0
    %437 = vmatpush1.bf16.msra.mxu0 %v72
    %438 = vmatprep.subr.bf16.mxu0 0
    %439 = vmatpush1.bf16.msra.mxu0 0
    %440 = vmatprep.subr.bf16.mxu0 0
    %441 = vmatpush1.bf16.msra.mxu0 0
    %442 = vmatprep.subr.bf16.mxu0 0
    %443 = vmatpush1.bf16.msra.mxu0 0
    %444 = vmatprep.subr.bf16.mxu0 0
    %445 = vmatpush1.bf16.msra.mxu0 0
    %446 = vmatprep.subr.bf16.mxu0 0
    %447 = vmatpush1.bf16.msra.mxu0 0
    %448 = vmatprep.subr.bf16.mxu0 0
    %449 = vmatpush1.bf16.msra.mxu0 0
    %450 = vmatprep.subr.bf16.mxu0 0
    %451 = vmatpush1.bf16.msra.mxu0 0
    %452 = vmatprep.subr.bf16.mxu0 0
    %453 = vmatpush1.bf16.msra.mxu0 0
    %454 = vmatprep.subr.bf16.mxu0 0
    %455 = vmatpush1.bf16.msra.mxu0 0
    %456 = vmatprep.subr.bf16.mxu0 0
    %457 = vmatpush1.bf16.msra.mxu0 0
    %458 = vmatprep.subr.bf16.mxu0 0
    %459 = vmatpush1.bf16.msra.mxu0 0
    %460 = vmatprep.subr.bf16.mxu0 0
    %461 = vmatpush1.bf16.msra.mxu0 0
    %462 = vmatprep.subr.bf16.mxu0 0
    %463 = vmatpush1.bf16.msra.mxu0 0
    %464 = vmatprep.subr.bf16.mxu0 0
    %465 = vmatpush1.bf16.msra.mxu0 0
    %466 = vmatprep.mubr.bf16.mxu0 0
    %467 = vmatmul.mubr.bf16.gmra.mrb[0].mxu0 %v432
    %v468 = vpop.f32.mrb[0].mxu0
    %v469 = vadd.f32 0.0, %v468
    %v470 = vpop.f32.mrb[0].mxu0
    %v471 = vpop.f32.mrb[0].mxu0
    %v472 = vpop.f32.mrb[0].mxu0
    %473 = vdwg.mxu0
    %v474 = vadd.f32 %v428, %v469
    %v475 = vtanh.pop %v474
    %v476 = vmul.f32 %v475, 0.5
    %v477 = vadd.f32 %v476, 0.5
    %v478 = vmul.f32 %v477, %v395
    %480 = vrot.lane.b32.xlu0 %v475, 32
    %v481 = vpop.permute.xlu0 %480
    %v483 = vmul.f32 %v477, %v481
    %485 = vrot.lane.b32.xlu0 %v483, 32
    %v486 = vpop.permute.xlu0 %485
    %v488 = vadd.f32 %v478, %v486
    %v489 = vtanh.pop %v488
    %491 = vrot.lane.b32.xlu0 %v489, 32
    %v492 = vpop.permute.xlu0 %491
    %v494 = vmul.f32 %v477, %v492
    %v495 = vpack.c.bf16 %v494, %v494
    %v498 = vunpack.c.l.s4 1966171168
    %v499 = vunpack.c.0.s8 %v498
    %v500 = vlaneseq
    %v501 = vshrl.u32 %v500, 7
    %v502 = vsub.s32 %v499, %v501
    %v503 = vrot.slane %v495, %v502
    %v505 = vunpack.c.l.s4 1966171168
    %v506 = vunpack.c.0.s8 %v505
    %v507 = vlaneseq
    %v508 = vshrl.u32 %v507, 7
    %v509 = vsub.s32 %v506, %v508
    %v510 = vrot.slane %v503, %v509
    %511 = vrot.lane.b32.xlu0 %v510, 64
    %v512 = vpop.permute.xlu0 %511
    %514 = vst.msk [vmem:[#allocation2 + $0x1] sm:$0x1] %vm159, %v512
    %515 = vset.pattern.permute.xlu0 5
    %516 = vperm.xlu0 %515, %v37
    %v517 = vpop.permute.xlu0 %516
    %v519 = vmul.f32 %v517, %v53
    %v520 = vadd.f32 %v519, %v60
    %521 = vrot.lane.b32.xlu0 %v495, 64
    %v522 = vpop.permute.xlu0 %521
    %v524 = vsel %vm75, %v522, 0
    %526 = vmatprep.subr.bf16.mxu0 0
    %527 = vmatpush1.bf16.msra.mxu0 %v71
    %528 = vmatprep.subr.bf16.mxu0 0
    %529 = vmatpush1.bf16.msra.mxu0 %v72
    %530 = vmatprep.subr.bf16.mxu0 0
    %531 = vmatpush1.bf16.msra.mxu0 0
    %532 = vmatprep.subr.bf16.mxu0 0
    %533 = vmatpush1.bf16.msra.mxu0 0
    %534 = vmatprep.subr.bf16.mxu0 0
    %535 = vmatpush1.bf16.msra.mxu0 0
    %536 = vmatprep.subr.bf16.mxu0 0
    %537 = vmatpush1.bf16.msra.mxu0 0
    %538 = vmatprep.subr.bf16.mxu0 0
    %539 = vmatpush1.bf16.msra.mxu0 0
    %540 = vmatprep.subr.bf16.mxu0 0
    %541 = vmatpush1.bf16.msra.mxu0 0
    %542 = vmatprep.subr.bf16.mxu0 0
    %543 = vmatpush1.bf16.msra.mxu0 0
    %544 = vmatprep.subr.bf16.mxu0 0
    %545 = vmatpush1.bf16.msra.mxu0 0
    %546 = vmatprep.subr.bf16.mxu0 0
    %547 = vmatpush1.bf16.msra.mxu0 0
    %548 = vmatprep.subr.bf16.mxu0 0
    %549 = vmatpush1.bf16.msra.mxu0 0
    %550 = vmatprep.subr.bf16.mxu0 0
    %551 = vmatpush1.bf16.msra.mxu0 0
    %552 = vmatprep.subr.bf16.mxu0 0
    %553 = vmatpush1.bf16.msra.mxu0 0
    %554 = vmatprep.subr.bf16.mxu0 0
    %555 = vmatpush1.bf16.msra.mxu0 0
    %556 = vmatprep.subr.bf16.mxu0 0
    %557 = vmatpush1.bf16.msra.mxu0 0
    %558 = vmatprep.mubr.bf16.mxu0 0
    %559 = vmatmul.mubr.bf16.gmra.mrb[0].mxu0 %v524
    %v560 = vpop.f32.mrb[0].mxu0
    %v561 = vadd.f32 0.0, %v560
    %v562 = vpop.f32.mrb[0].mxu0
    %v563 = vpop.f32.mrb[0].mxu0
    %v564 = vpop.f32.mrb[0].mxu0
    %565 = vdwg.mxu0
    %v566 = vadd.f32 %v520, %v561
    %v567 = vtanh.pop %v566
    %v568 = vmul.f32 %v567, 0.5
    %v569 = vadd.f32 %v568, 0.5
    %v570 = vmul.f32 %v569, %v488
    %572 = vrot.lane.b32.xlu0 %v567, 32
    %v573 = vpop.permute.xlu0 %572
    %v575 = vmul.f32 %v569, %v573
    %577 = vrot.lane.b32.xlu0 %v575, 32
    %v578 = vpop.permute.xlu0 %577
    %v580 = vadd.f32 %v570, %v578
    %v581 = vtanh.pop %v580
    %583 = vrot.lane.b32.xlu0 %v581, 32
    %v584 = vpop.permute.xlu0 %583
    %v586 = vmul.f32 %v569, %v584
    %v587 = vpack.c.bf16 %v586, %v586
    %v590 = vunpack.c.l.s4 1966171168
    %v591 = vunpack.c.0.s8 %v590
    %v592 = vlaneseq
    %v593 = vshrl.u32 %v592, 7
    %v594 = vsub.s32 %v591, %v593
    %v595 = vrot.slane %v587, %v594
    %v597 = vunpack.c.l.s4 1966171168
    %v598 = vunpack.c.0.s8 %v597
    %v599 = vlaneseq
    %v600 = vshrl.u32 %v599, 7
    %v601 = vsub.s32 %v598, %v600
    %v602 = vrot.slane %v595, %v601
    %603 = vrot.lane.b32.xlu0 %v602, 96
    %v604 = vpop.permute.xlu0 %603
    %606 = vst.msk [vmem:[#allocation2 + $0x1] sm:$0x1] %vm252, %v604
    %607 = vset.pattern.permute.xlu0 6
    %608 = vperm.xlu0 %607, %v37
    %v609 = vpop.permute.xlu0 %608
    %v611 = vmul.f32 %v609, %v53
    %v612 = vadd.f32 %v611, %v60
    %613 = vrot.lane.b32.xlu0 %v587, 64
    %v614 = vpop.permute.xlu0 %613
    %v616 = vsel %vm75, %v614, 0
    %618 = vmatprep.subr.bf16.mxu0 0
    %619 = vmatpush1.bf16.msra.mxu0 %v71
    %620 = vmatprep.subr.bf16.mxu0 0
    %621 = vmatpush1.bf16.msra.mxu0 %v72
    %622 = vmatprep.subr.bf16.mxu0 0
    %623 = vmatpush1.bf16.msra.mxu0 0
    %624 = vmatprep.subr.bf16.mxu0 0
    %625 = vmatpush1.bf16.msra.mxu0 0
    %626 = vmatprep.subr.bf16.mxu0 0
    %627 = vmatpush1.bf16.msra.mxu0 0
    %628 = vmatprep.subr.bf16.mxu0 0
    %629 = vmatpush1.bf16.msra.mxu0 0
    %630 = vmatprep.subr.bf16.mxu0 0
    %631 = vmatpush1.bf16.msra.mxu0 0
    %632 = vmatprep.subr.bf16.mxu0 0
    %633 = vmatpush1.bf16.msra.mxu0 0
    %634 = vmatprep.subr.bf16.mxu0 0
    %635 = vmatpush1.bf16.msra.mxu0 0
    %636 = vmatprep.subr.bf16.mxu0 0
    %637 = vmatpush1.bf16.msra.mxu0 0
    %638 = vmatprep.subr.bf16.mxu0 0
    %639 = vmatpush1.bf16.msra.mxu0 0
    %640 = vmatprep.subr.bf16.mxu0 0
    %641 = vmatpush1.bf16.msra.mxu0 0
    %642 = vmatprep.subr.bf16.mxu0 0
    %643 = vmatpush1.bf16.msra.mxu0 0
    %644 = vmatprep.subr.bf16.mxu0 0
    %645 = vmatpush1.bf16.msra.mxu0 0
    %646 = vmatprep.subr.bf16.mxu0 0
    %647 = vmatpush1.bf16.msra.mxu0 0
    %648 = vmatprep.subr.bf16.mxu0 0
    %649 = vmatpush1.bf16.msra.mxu0 0
    %650 = vmatprep.mubr.bf16.mxu0 0
    %651 = vmatmul.mubr.bf16.gmra.mrb[0].mxu0 %v616
    %v652 = vpop.f32.mrb[0].mxu0
    %v653 = vadd.f32 0.0, %v652
    %v654 = vpop.f32.mrb[0].mxu0
    %v655 = vpop.f32.mrb[0].mxu0
    %v656 = vpop.f32.mrb[0].mxu0
    %657 = vdwg.mxu0
    %v658 = vadd.f32 %v612, %v653
    %v659 = vtanh.pop %v658
    %v660 = vmul.f32 %v659, 0.5
    %v661 = vadd.f32 %v660, 0.5
    %v662 = vmul.f32 %v661, %v580
    %664 = vrot.lane.b32.xlu0 %v659, 32
    %v665 = vpop.permute.xlu0 %664
    %v667 = vmul.f32 %v661, %v665
    %669 = vrot.lane.b32.xlu0 %v667, 32
    %v670 = vpop.permute.xlu0 %669
    %v672 = vadd.f32 %v662, %v670
    %v673 = vtanh.pop %v672
    %675 = vrot.lane.b32.xlu0 %v673, 32
    %v676 = vpop.permute.xlu0 %675
    %v678 = vmul.f32 %v661, %v676
    %v679 = vpack.c.bf16 %v678, %v678
    %680 = vst.msk [vmem:[#allocation2 + $0x1] sm:$0x1] %vm327, %v679
    %681 = vset.pattern.permute.xlu0 7
    %682 = vperm.xlu0 %681, %v37
    %v683 = vpop.permute.xlu0 %682
    %v685 = vmul.f32 %v683, %v53
    %v686 = vadd.f32 %v685, %v60
    %688 = vrot.lane.b32.xlu0 %v679, 64
    %v689 = vpop.permute.xlu0 %688
    %v691 = vsel %vm75, %v689, 0
    %693 = vmatprep.subr.bf16.mxu0 0
    %694 = vmatpush1.bf16.msra.mxu0 %v71
    %695 = vmatprep.subr.bf16.mxu0 0
    %696 = vmatpush1.bf16.msra.mxu0 %v72
    %697 = vmatprep.subr.bf16.mxu0 0
    %698 = vmatpush1.bf16.msra.mxu0 0
    %699 = vmatprep.subr.bf16.mxu0 0
    %700 = vmatpush1.bf16.msra.mxu0 0
    %701 = vmatprep.subr.bf16.mxu0 0
    %702 = vmatpush1.bf16.msra.mxu0 0
    %703 = vmatprep.subr.bf16.mxu0 0
    %704 = vmatpush1.bf16.msra.mxu0 0
    %705 = vmatprep.subr.bf16.mxu0 0
    %706 = vmatpush1.bf16.msra.mxu0 0
    %707 = vmatprep.subr.bf16.mxu0 0
    %708 = vmatpush1.bf16.msra.mxu0 0
    %709 = vmatprep.subr.bf16.mxu0 0
    %710 = vmatpush1.bf16.msra.mxu0 0
    %711 = vmatprep.subr.bf16.mxu0 0
    %712 = vmatpush1.bf16.msra.mxu0 0
    %713 = vmatprep.subr.bf16.mxu0 0
    %714 = vmatpush1.bf16.msra.mxu0 0
    %715 = vmatprep.subr.bf16.mxu0 0
    %716 = vmatpush1.bf16.msra.mxu0 0
    %717 = vmatprep.subr.bf16.mxu0 0
    %718 = vmatpush1.bf16.msra.mxu0 0
    %719 = vmatprep.subr.bf16.mxu0 0
    %720 = vmatpush1.bf16.msra.mxu0 0
    %721 = vmatprep.subr.bf16.mxu0 0
    %722 = vmatpush1.bf16.msra.mxu0 0
    %723 = vmatprep.subr.bf16.mxu0 0
    %724 = vmatpush1.bf16.msra.mxu0 0
    %725 = vmatprep.mubr.bf16.mxu0 0
    %726 = vmatmul.mubr.bf16.gmra.mrb[0].mxu0 %v691
    %v727 = vpop.f32.mrb[0].mxu0
    %v728 = vadd.f32 0.0, %v727
    %v729 = vpop.f32.mrb[0].mxu0
    %v730 = vpop.f32.mrb[0].mxu0
    %v731 = vpop.f32.mrb[0].mxu0
    %732 = vdwg.mxu0
    %v733 = vadd.f32 %v686, %v728
    %v734 = vtanh.pop %v733
    %v735 = vmul.f32 %v734, 0.5
    %v736 = vadd.f32 %v735, 0.5
    %v737 = vmul.f32 %v736, %v672
    %739 = vrot.lane.b32.xlu0 %v734, 32
    %v740 = vpop.permute.xlu0 %739
    %v742 = vmul.f32 %v736, %v740
    %744 = vrot.lane.b32.xlu0 %v742, 32
    %v745 = vpop.permute.xlu0 %744
    %v747 = vadd.f32 %v737, %v745
    %v748 = vtanh.pop %v747
    %750 = vrot.lane.b32.xlu0 %v748, 32
    %v751 = vpop.permute.xlu0 %750
    %v753 = vmul.f32 %v736, %v751
    %v754 = vpack.c.bf16 %v753, %v753
    %v757 = vunpack.c.l.s4 1966171168
    %v758 = vunpack.c.0.s8 %v757
    %v759 = vlaneseq
    %v760 = vshrl.u32 %v759, 7
    %v761 = vsub.s32 %v758, %v760
    %v762 = vrot.slane %v754, %v761
    %v764 = vunpack.c.l.s4 1966171168
    %v765 = vunpack.c.0.s8 %v764
    %v766 = vlaneseq
    %v767 = vshrl.u32 %v766, 7
    %v768 = vsub.s32 %v765, %v767
    %v769 = vrot.slane %v762, %v768
    %770 = vrot.lane.b32.xlu0 %v769, 32
    %v771 = vpop.permute.xlu0 %770
    %773 = vst.msk [vmem:[#allocation2 + $0x1] sm:$0x1] %vm421, %v771
    %v774 = vld [vmem:[#allocation2] sm:$0x3]
    %v775 = vld [vmem:[%s4] sm:$0xf]
    %v776 = vld [vmem:[%s4 + $0x4] sm:$0xf]
    %v777 = vld [vmem:[%s4 + $0x8] sm:$0xf]
    %v778 = vld [vmem:[%s4 + $0xc] sm:$0xf]
    %v779 = vld [vmem:[%s4 + $0x10] sm:$0xf]
    %v780 = vld [vmem:[%s4 + $0x14] sm:$0xf]
    %v781 = vld [vmem:[%s4 + $0x18] sm:$0xf]
    %v782 = vld [vmem:[%s4 + $0x1c] sm:$0xf]
    %v783 = vld [vmem:[%s4 + $0x20] sm:$0xf]
    %v784 = vld [vmem:[%s4 + $0x24] sm:$0xf]
    %v785 = vld [vmem:[%s4 + $0x28] sm:$0xf]
    %v786 = vld [vmem:[%s4 + $0x2c] sm:$0xf]
    %v787 = vld [vmem:[%s4 + $0x30] sm:$0xf]
    %v788 = vld [vmem:[%s4 + $0x34] sm:$0xf]
    %v789 = vld [vmem:[%s4 + $0x38] sm:$0xf]
    %v790 = vld [vmem:[%s4 + $0x3c] sm:$0xf]
    %v791 = vld [vmem:[%s4 + $0x40] sm:$0xf]
    %v792 = vld [vmem:[%s4 + $0x44] sm:$0xf]
    %v793 = vld [vmem:[%s4 + $0x48] sm:$0xf]
    %v794 = vld [vmem:[%s4 + $0x4c] sm:$0xf]
    %v795 = vld [vmem:[%s4 + $0x50] sm:$0xf]
    %v796 = vld [vmem:[%s4 + $0x54] sm:$0xf]
    %v797 = vld [vmem:[%s4 + $0x58] sm:$0xf]
    %v798 = vld [vmem:[%s4 + $0x5c] sm:$0xf]
    %v799 = vld [vmem:[%s4 + $0x60] sm:$0xf]
    %v800 = vld [vmem:[%s4 + $0x64] sm:$0xf]
    %v801 = vld [vmem:[%s4 + $0x68] sm:$0xf]
    %v802 = vld [vmem:[%s4 + $0x6c] sm:$0xf]
    %v803 = vld [vmem:[%s4 + $0x70] sm:$0xf]
    %v804 = vld [vmem:[%s4 + $0x74] sm:$0xf]
    %v805 = vld [vmem:[%s4 + $0x78] sm:$0xf]
    %v806 = vld [vmem:[%s4 + $0x7c] sm:$0xf]
    %v807 = vld [vmem:[%s5] sm:$0x1]
    %v809 = vlaneseq
    %v810 = vshrl.u32 %v809, 7
    %v811 = vsub.s32 0, %v810
    %v812 = vrot.slane %v807, %v811
    %v816 = vunpack.c.l.s4 1966171168
    %v817 = vunpack.c.0.s8 %v816
    %v818 = vlaneseq
    %v819 = vshrl.u32 %v818, 7
    %v820 = vsub.s32 %v817, %v819
    %v821 = vrot.slane %v774, %v820
    %v822 = vcombine.high %v821, %v821
    %v824 = vunpack.c.l.s4 1966171168
    %v825 = vunpack.c.0.s8 %v824
    %v826 = vlaneseq
    %v827 = vshrl.u32 %v826, 7
    %v828 = vsub.s32 %v825, %v827
    %v829 = vrot.slane %v821, %v828
    %v831 = vunpack.c.l.s4 1966171168
    %v832 = vunpack.c.0.s8 %v831
    %v833 = vlaneseq
    %v834 = vshrl.u32 %v833, 7
    %v835 = vsub.s32 %v832, %v834
    %v836 = vrot.slane %v822, %v835
    %v871 = vunpack.c.l.b16 %v775
    %v872 = vunpack.c.l.b16 %v776
    %v873 = vunpack.c.l.b16 %v777
    %v874 = vunpack.c.l.b16 %v778
    %v875 = vunpack.c.l.b16 %v779
    %v876 = vunpack.c.l.b16 %v780
    %v877 = vunpack.c.l.b16 %v781
    %v878 = vunpack.c.l.b16 %v782
    %v879 = vunpack.c.l.b16 %v783
    %v880 = vunpack.c.l.b16 %v784
    %v881 = vunpack.c.l.b16 %v785
    %v882 = vunpack.c.l.b16 %v786
    %v883 = vunpack.c.l.b16 %v787
    %v884 = vunpack.c.l.b16 %v788
    %v885 = vunpack.c.l.b16 %v789
    %v886 = vunpack.c.l.b16 %v790
    %v887 = vunpack.c.l.b16 %v791
    %v888 = vunpack.c.l.b16 %v792
    %v889 = vunpack.c.l.b16 %v793
    %v890 = vunpack.c.l.b16 %v794
    %v891 = vunpack.c.l.b16 %v795
    %v892 = vunpack.c.l.b16 %v796
    %v893 = vunpack.c.l.b16 %v797
    %v894 = vunpack.c.l.b16 %v798
    %v895 = vunpack.c.l.b16 %v799
    %v896 = vunpack.c.l.b16 %v800
    %v897 = vunpack.c.l.b16 %v801
    %v898 = vunpack.c.l.b16 %v802
    %v899 = vunpack.c.l.b16 %v803
    %v900 = vunpack.c.l.b16 %v804
    %v901 = vunpack.c.l.b16 %v805
    %v902 = vunpack.c.l.b16 %v806
    %v903 = vpack.c.b16 %v872, %v871
    %v904 = vpack.c.b16 %v874, %v873
    %v905 = vpack.c.b16 %v876, %v875
    %v906 = vpack.c.b16 %v878, %v877
    %v907 = vpack.c.b16 %v880, %v879
    %v908 = vpack.c.b16 %v882, %v881
    %v909 = vpack.c.b16 %v884, %v883
    %v910 = vpack.c.b16 %v886, %v885
    %v911 = vpack.c.b16 %v888, %v887
    %v912 = vpack.c.b16 %v890, %v889
    %v913 = vpack.c.b16 %v892, %v891
    %v914 = vpack.c.b16 %v894, %v893
    %v915 = vpack.c.b16 %v896, %v895
    %v916 = vpack.c.b16 %v898, %v897
    %v917 = vpack.c.b16 %v900, %v899
    %v918 = vpack.c.b16 %v902, %v901
    %935 = vmatprep.subr.bf16.mxu0 0
    %936 = vmatpush1.bf16.msra.mxu0 %v903
    %937 = vmatprep.subr.bf16.mxu0 0
    %938 = vmatpush1.bf16.msra.mxu0 %v904
    %939 = vmatprep.subr.bf16.mxu0 0
    %940 = vmatpush1.bf16.msra.mxu0 %v905
    %941 = vmatprep.subr.bf16.mxu0 0
    %942 = vmatpush1.bf16.msra.mxu0 %v906
    %943 = vmatprep.subr.bf16.mxu0 0
    %944 = vmatpush1.bf16.msra.mxu0 %v907
    %945 = vmatprep.subr.bf16.mxu0 0
    %946 = vmatpush1.bf16.msra.mxu0 %v908
    %947 = vmatprep.subr.bf16.mxu0 0
    %948 = vmatpush1.bf16.msra.mxu0 %v909
    %949 = vmatprep.subr.bf16.mxu0 0
    %950 = vmatpush1.bf16.msra.mxu0 %v910
    %951 = vmatprep.subr.bf16.mxu0 0
    %952 = vmatpush1.bf16.msra.mxu0 %v911
    %953 = vmatprep.subr.bf16.mxu0 0
    %954 = vmatpush1.bf16.msra.mxu0 %v912
    %955 = vmatprep.subr.bf16.mxu0 0
    %956 = vmatpush1.bf16.msra.mxu0 %v913
    %957 = vmatprep.subr.bf16.mxu0 0
    %958 = vmatpush1.bf16.msra.mxu0 %v914
    %959 = vmatprep.subr.bf16.mxu0 0
    %960 = vmatpush1.bf16.msra.mxu0 %v915
    %961 = vmatprep.subr.bf16.mxu0 0
    %962 = vmatpush1.bf16.msra.mxu0 %v916
    %963 = vmatprep.subr.bf16.mxu0 0
    %964 = vmatpush1.bf16.msra.mxu0 %v917
    %965 = vmatprep.subr.bf16.mxu0 0
    %966 = vmatpush1.bf16.msra.mxu0 %v918
    %967 = vmatprep.mubr.bf16.mxu0 %v836
    %968 = vmatmul.mubr.bf16.gmra.mrb[0].mxu0 %v829
    %v969 = vpop.f32.mrb[0].mxu0
    %v970 = vadd.f32 %v812, %v969
    %v971 = vpop.f32.mrb[0].mxu0
    %v972 = vpop.f32.mrb[0].mxu0
    %v973 = vpop.f32.mrb[0].mxu0
    %974 = vdwg.mxu0
    %v975 = vmax.f32 %v970, 0.0
    %v976 = vpack.c.bf16 %v975, %v975
    %v977 = vld [vmem:[%s6] sm:$0xf]
    %v978 = vld [vmem:[%s6 + $0x4] sm:$0xf]
    %v979 = vld [vmem:[%s6 + $0x8] sm:$0xf]
    %v980 = vld [vmem:[%s6 + $0xc] sm:$0xf]
    %v981 = vld [vmem:[%s7] sm:$0x1]
    %v983 = vlaneseq
    %v984 = vshrl.u32 %v983, 7
    %v985 = vsub.s32 0, %v984
    %v986 = vrot.slane %v981, %v985
    %v992 = vunpack.c.l.b16 %v977
    %v993 = vunpack.c.l.b16 %v978
    %v994 = vunpack.c.l.b16 %v979
    %v995 = vunpack.c.l.b16 %v980
    %v996 = vpack.c.b16 %v993, %v992
    %v997 = vpack.c.b16 %v995, %v994
    %v1001 = vsel %vm75, %v976, 0
    %1003 = vmatprep.subr.bf16.mxu0 0
    %1004 = vmatpush1.bf16.msra.mxu0 %v996
    %1005 = vmatprep.subr.bf16.mxu0 0
    %1006 = vmatpush1.bf16.msra.mxu0 %v997
    %1007 = vmatprep.subr.bf16.mxu0 0
    %1008 = vmatpush1.bf16.msra.mxu0 0
    %1009 = vmatprep.subr.bf16.mxu0 0
    %1010 = vmatpush1.bf16.msra.mxu0 0
    %1011 = vmatprep.subr.bf16.mxu0 0
    %1012 = vmatpush1.bf16.msra.mxu0 0
    %1013 = vmatprep.subr.bf16.mxu0 0
    %1014 = vmatpush1.bf16.msra.mxu0 0
    %1015 = vmatprep.subr.bf16.mxu0 0
    %1016 = vmatpush1.bf16.msra.mxu0 0
    %1017 = vmatprep.subr.bf16.mxu0 0
    %1018 = vmatpush1.bf16.msra.mxu0 0
    %1019 = vmatprep.subr.bf16.mxu0 0
    %1020 = vmatpush1.bf16.msra.mxu0 0
    %1021 = vmatprep.subr.bf16.mxu0 0
    %1022 = vmatpush1.bf16.msra.mxu0 0
    %1023 = vmatprep.subr.bf16.mxu0 0
    %1024 = vmatpush1.bf16.msra.mxu0 0
    %1025 = vmatprep.subr.bf16.mxu0 0
    %1026 = vmatpush1.bf16.msra.mxu0 0
    %1027 = vmatprep.subr.bf16.mxu0 0
    %1028 = vmatpush1.bf16.msra.mxu0 0
    %1029 = vmatprep.subr.bf16.mxu0 0
    %1030 = vmatpush1.bf16.msra.mxu0 0
    %1031 = vmatprep.subr.bf16.mxu0 0
    %1032 = vmatpush1.bf16.msra.mxu0 0
    %1033 = vmatprep.subr.bf16.mxu0 0
    %1034 = vmatpush1.bf16.msra.mxu0 0
    %1035 = vmatprep.mubr.bf16.mxu0 0
    %1036 = vmatmul.mubr.bf16.gmra.mrb[0].mxu0 %v1001
    %v1037 = vpop.f32.mrb[0].mxu0
    %v1038 = vadd.f32 %v986, %v1037
    %v1039 = vpop.f32.mrb[0].mxu0
    %v1040 = vpop.f32.mrb[0].mxu0
    %v1041 = vpop.f32.mrb[0].mxu0
    %1042 = vdwg.mxu0
    %v1043 = vmax.f32 %v1038, 0.0
    %v1044 = vpack.c.bf16 %v1043, %v1043
    %v1045 = vld [vmem:[%s8] sm:$0xf]
    %v1046 = vld [vmem:[%s8 + $0x4] sm:$0xf]
    %v1047 = vld [vmem:[%s9] sm:$0x1]
    %v1049 = vlaneseq
    %v1050 = vshrl.u32 %v1049, 7
    %v1051 = vsub.s32 0, %v1050
    %v1052 = vrot.slane %v1047, %v1051
    %v1056 = vunpack.c.l.b16 %v1045
    %v1057 = vunpack.c.l.b16 %v1046
    %v1058 = vpack.c.b16 %v1057, %v1056
    %vm1060 = vcmask 130048
    %v1062 = vsel %vm1060, %v1044, 0
    %1064 = vmatprep.subr.bf16.mxu0 0
    %1065 = vmatpush1.bf16.msra.mxu0 %v1058
    %1066 = vmatprep.subr.bf16.mxu0 0
    %1067 = vmatpush1.bf16.msra.mxu0 0
    %1068 = vmatprep.subr.bf16.mxu0 0
    %1069 = vmatpush1.bf16.msra.mxu0 0
    %1070 = vmatprep.subr.bf16.mxu0 0
    %1071 = vmatpush1.bf16.msra.mxu0 0
    %1072 = vmatprep.subr.bf16.mxu0 0
    %1073 = vmatpush1.bf16.msra.mxu0 0
    %1074 = vmatprep.subr.bf16.mxu0 0
    %1075 = vmatpush1.bf16.msra.mxu0 0
    %1076 = vmatprep.subr.bf16.mxu0 0
    %1077 = vmatpush1.bf16.msra.mxu0 0
    %1078 = vmatprep.subr.bf16.mxu0 0
    %1079 = vmatpush1.bf16.msra.mxu0 0
    %1080 = vmatprep.subr.bf16.mxu0 0
    %1081 = vmatpush1.bf16.msra.mxu0 0
    %1082 = vmatprep.subr.bf16.mxu0 0
    %1083 = vmatpush1.bf16.msra.mxu0 0
    %1084 = vmatprep.subr.bf16.mxu0 0
    %1085 = vmatpush1.bf16.msra.mxu0 0
    %1086 = vmatprep.subr.bf16.mxu0 0
    %1087 = vmatpush1.bf16.msra.mxu0 0
    %1088 = vmatprep.subr.bf16.mxu0 0
    %1089 = vmatpush1.bf16.msra.mxu0 0
    %1090 = vmatprep.subr.bf16.mxu0 0
    %1091 = vmatpush1.bf16.msra.mxu0 0
    %1092 = vmatprep.subr.bf16.mxu0 0
    %1093 = vmatpush1.bf16.msra.mxu0 0
    %1094 = vmatprep.subr.bf16.mxu0 0
    %1095 = vmatpush1.bf16.msra.mxu0 0
    %1096 = vmatprep.mubr.bf16.mxu0 0
    %1097 = vmatmul.mubr.bf16.gmra.mrb[0].mxu0 %v1062
    %v1098 = vpop.f32.mrb[0].mxu0
    %v1099 = vadd.f32 %v1052, %v1098
    %v1100 = vpop.f32.mrb[0].mxu0
    %v1101 = vpop.f32.mrb[0].mxu0
    %v1102 = vpop.f32.mrb[0].mxu0
    %1103 = vdwg.mxu0
    %vm1104 = vcmask 33792
    %1105 = vst.msk [vmem:[#allocation3] sm:$0x3] %vm1104, %v1099
    // Predicated region
    $region42: #{tpu_custom_call.1} parent=1 // pred_check
      _
    $region43: #{tpu_custom_call.1} parent=1 // pred_check_branch
      %1107 = sbr.rel (0) target = $region45
    $region44: #{tpu_custom_call.1} parent=1 // pred_region
      %s1109 = ssub.s32 32, 32
      %1110 = vsyncadd [#allocation4], %s1109
      %s1112 = sshll.u32 [#allocation3], 4
      %s1113 = int_to_ptr.vmem [resolvable:$true] %s1112
      %1115 = dma.vmem_to_hbm [thread:$0]  %s1113, 32, %s10, [#allocation4]
    $region45: #{tpu_custom_call.1} parent=1 // pred_fallthru
      _
    // Predicated region
    $region46: #{tpu_custom_call.1} parent=1 // pred_check
      _
    $region47: #{tpu_custom_call.1} parent=1 // pred_check_branch
      %1117 = sbr.rel (0) target = $region49
    $region48: #{tpu_custom_call.1} parent=1 // pred_region
      %1118 = dma.done [#allocation4], 32
    $region49: #{tpu_custom_call.1} parent=1 // pred_fallthru
      _
    %1119 = vsyncpa [#allocation4], 1

</llo_original>
